<compile_context>
chip_gen: v7x
topology: tpu7x:2x2x1
jax: 0.10.0
libtpu: 0.0.40
codegen_flags: <defaults>
</compile_context>

<pallas_src>
import jax
import jax.numpy as jnp
from jax import lax
from jax.experimental import pallas as pl
from jax.experimental.pallas import tpu as pltpu


# Per-dimension tap table T[parity, shift, kernel_index]:
#   even output 2m   :  x[m]   * W[k=1]
#   odd  output 2m+1 :  x[m]   * W[k=2]  +  x[m+1] * W[k=0]
_TAPS_T = jnp.asarray(
    [[[0.0, 1.0, 0.0], [0.0, 0.0, 0.0]],
     [[0.0, 0.0, 1.0], [1.0, 0.0, 0.0]]], dtype=jnp.float32)


def _deconv_bn_relu_kernel(x_ref, w_ref, shift_ref, out_ref):
    # x_ref:     (1, K, M)  bf16   K = 8*Cin (shift-concatenated channels), M = td*H*W
    # w_ref:     (R, K)     bf16   R = 8*Cout (parity-major), BN scale folded in
    # shift_ref: (R, 1)     f32    conv bias + BN shift, tiled over parities
    # out_ref:   (1, R, M)  bf16
    acc = jnp.dot(w_ref[...], x_ref[0],
                  preferred_element_type=jnp.float32)          # (R, M) f32
    out_ref[0] = jnp.maximum(acc + shift_ref[...], 0.0).astype(out_ref.dtype)


def _round_up(x, m):
    return (x + m - 1) // m * m


def _padded_tile_bytes(td, hh, ww, k_in, r_out):
    """(sublane, lane)-padded VMEM bytes of one input / one output tile (bf16)."""
    lane_m = _round_up(td * hh * ww, 128)
    in_b = _round_up(k_in, 16) * lane_m * 2
    out_b = _round_up(r_out, 16) * lane_m * 2
    return in_b, out_b


def _vmem_budget_bytes():
    """Per-chip working-set budget (padded sizes).  Conservative v7x-safe fallback."""
    try:
        info = pltpu.get_tpu_info()
        cap = getattr(info, "vmem_capacity_bytes", None)
        if cap:
            return max(int(cap) // 3, 8 * 1024 * 1024)
    except Exception:
        pass
    return 20 * 1024 * 1024


def _pick_tile_d(n, d, hh, ww, k_in, r_out, vmem_budget):
    """Largest divisor of d whose PADDED per-step working set fits the budget.
    Only force-split D when the batch axis alone gives < 2 grid points."""
    w_b = _round_up(r_out, 16) * _round_up(k_in, 128) * 2          # packed weight
    s_b = _round_up(r_out, 8) * 128 * 4                            # shift column

    def valid(td):
        return d % td == 0 and ((td * hh * ww) % 128 == 0 or td == d)

    cands = []
    for td in range(1, d + 1):
        if not valid(td):
            continue
        in_b, out_b = _padded_tile_bytes(td, hh, ww, k_in, r_out)
        ws = 2 * (in_b + out_b) + w_b + s_b                        # double-buffered
        if ws <= vmem_budget:
            cands.append((td, ws))
    if not cands:
        td = next(t for t in range(1, d + 1) if valid(t))
        in_b, out_b = _padded_tile_bytes(td, hh, ww, k_in, r_out)
        return td, 2 * (in_b + out_b) + w_b + s_b

    td, ws = max(cands, key=lambda c: c[0])
    if n * (d // td) < 2:                                          # megacore: >=2 steps
        smaller = [c for c in cands if d // c[0] >= 2]
        if smaller:
            td, ws = max(smaller, key=lambda c: c[0])
    return td, ws


def deconv3d_forward(x_ncdhw, w_t, bias, gamma, beta, run_mean, run_var, eps=1e-5):
    """ConvTranspose3d(k=3, s=2, p=1, op=1) + BatchNorm3d(eval) + ReLU.

    x_ncdhw : (N, Cin, D, H, W)      -- PyTorch layout
    w_t     : (Cin, Cout, 3, 3, 3)   -- PyTorch ConvTranspose3d weight layout
    returns : (N, Cout, 2D, 2H, 2W)  bf16
    """
    n, c_in, d, hh, ww = x_ncdhw.shape
    c_out = w_t.shape[1]
    k_in = 8 * c_in        # contraction dim (8 shifts x Cin)
    r_out = 8 * c_out      # output rows (8 parities x Cout)
    dhw = d * hh * ww

    # ---- fold conv bias + eval-mode BN: scale into weights, shift stays --------
    scale = (gamma / jnp.sqrt(run_var + eps)).astype(jnp.float32)            # (Cout,)
    shift = (beta + (bias - run_mean) * scale).astype(jnp.float32)           # (Cout,)
    shift_rows = jnp.tile(shift, 8).reshape(r_out, 1)                        # (8*Cout, 1)

    # ---- packed block weight (8*Cout, 8*Cin): all parities & taps in one matmul
    w_scaled = w_t.astype(jnp.float32) * scale[None, :, None, None, None]    # (Cin,Cout,3,3,3)
    w_block = jnp.einsum('adk,bel,cfm,ioklm->abcodefi',
                         _TAPS_T, _TAPS_T, _TAPS_T, w_scaled)                # (2,2,2,Co,2,2,2,Ci)
    w_block = w_block.reshape(r_out, k_in).astype(jnp.bfloat16)

    # ---- im2col-lite patches straight from NCDHW: pad-right + 8 shifted slices,
    #      concatenated on the channel axis, spatial flattened on the lane axis.
    x_b = x_ncdhw.astype(jnp.bfloat16)
    x_pad = jnp.pad(x_b, ((0, 0), (0, 0), (0, 1), (0, 1), (0, 1)))
    shifts = []
    for sd in (0, 1):
        for sh in (0, 1):
            for sw in (0, 1):
                shifts.append(x_pad[:, :, sd:sd + d, sh:sh + hh, sw:sw + ww])
    patches = jnp.concatenate(shifts, axis=1).reshape(n, k_in, dhw)          # (N, 8Cin, DHW)

    # ---- tiling over D (no halo needed: patches already carry the +1 shifts) ---
    budget = _vmem_budget_bytes()
    td, ws = _pick_tile_d(n, d, hh, ww, k_in, r_out, budget)
    n_t = d // td
    m_tile = td * hh * ww

    cost = pl.CostEstimate(
        flops=2 * n * dhw * k_in * r_out,
        transcendentals=0,
        bytes_accessed=int(patches.size * 2 + w_block.size * 2
                           + shift_rows.size * 4 + n * r_out * dhw * 2))

    out = pl.pallas_call(
        _deconv_bn_relu_kernel,
        out_shape=jax.ShapeDtypeStruct((n, r_out, dhw), jnp.bfloat16),
        grid_spec=pltpu.PrefetchScalarGridSpec(
            num_scalar_prefetch=0,
            grid=(n, n_t),
            in_specs=[
                pl.BlockSpec((1, k_in, m_tile), lambda i, t: (i, 0, t)),
                pl.BlockSpec((r_out, k_in), lambda i, t: (0, 0)),
                pl.BlockSpec((r_out, 1), lambda i, t: (0, 0)),
            ],
            out_specs=pl.BlockSpec((1, r_out, m_tile), lambda i, t: (i, 0, t)),
        ),
        compiler_params=pltpu.CompilerParams(
            dimension_semantics=("parallel", "parallel"),
            vmem_limit_bytes=int(min(max(2 * ws, 16 * 1024 * 1024),
                                     48 * 1024 * 1024))),
        cost_estimate=cost,
    )(patches, w_block, shift_rows)

    # ---- parity -> spatial interleave, done in bf16 (one XLA transpose). -------
    # A downstream consumer could keep the grouped (N, 8*Cout, D*H*W) layout.
    out = out.reshape(n, 2, 2, 2, c_out, d, hh, ww)          # (N, pd, ph, pw, C, D, H, W)
    out = jnp.transpose(out, (0, 4, 5, 1, 6, 2, 7, 3))       # (N, C, D, pd, H, ph, W, pw)
    return out.reshape(n, c_out, 2 * d, 2 * hh, 2 * ww)


def _reference(x_ncdhw, w_t, bias, gamma, beta, run_mean, run_var, eps=1e-5):
    """Pure-JAX f32 reference for the same forward (eval-mode BN)."""
    x = jnp.transpose(x_ncdhw, (0, 2, 3, 4, 1))
    rhs = jnp.transpose(w_t[:, :, ::-1, ::-1, ::-1], (2, 3, 4, 0, 1))  # DHWIO
    y = lax.conv_general_dilated(
        x, rhs, window_strides=(1, 1, 1),
        padding=[(1, 2), (1, 2), (1, 2)], lhs_dilation=(2, 2, 2),
        dimension_numbers=('NDHWC', 'DHWIO', 'NDHWC'),
        precision=lax.Precision.HIGHEST)
    y = y + bias
    scale = gamma / jnp.sqrt(run_var + eps)
    y = (y - run_mean) * scale + beta
    y = jnp.maximum(y, 0.0)
    return jnp.transpose(y, (0, 4, 1, 2, 3))


if __name__ == "__main__":
    key = jax.random.PRNGKey(0)
    N, Cin, Cout, D, H, W = 2, 4, 8, 16, 16, 16

    k1, k2, k3, k4, k5, k6, k7 = jax.random.split(key, 7)
    x = jax.random.normal(k1, (N, Cin, D, H, W), jnp.float32)
    # Deterministic parameter init (shapes match nn.ConvTranspose3d / BatchNorm3d)
    w_t = jax.random.normal(k2, (Cin, Cout, 3, 3, 3), jnp.float32) / jnp.sqrt(Cin * 27)
    bias = 0.1 * jax.random.normal(k3, (Cout,), jnp.float32)
    gamma = 1.0 + 0.1 * jax.random.normal(k4, (Cout,), jnp.float32)
    beta = 0.1 * jax.random.normal(k5, (Cout,), jnp.float32)
    run_mean = 0.1 * jax.random.normal(k6, (Cout,), jnp.float32)
    run_var = jnp.abs(1.0 + 0.1 * jax.random.normal(k7, (Cout,), jnp.float32))

    out = deconv3d_forward(x, w_t, bias, gamma, beta, run_mean, run_var)
    out = jax.block_until_ready(out)
    assert out.shape == (N, Cout, 2 * D, 2 * H, 2 * W), out.shape

    ref = _reference(x, w_t, bias, gamma, beta, run_mean, run_var)
    out_f32 = out.astype(jnp.float32)
    max_err = float(jnp.max(jnp.abs(out_f32 - ref)))
    # bf16 inputs/weights/outputs with f32 accumulation -> loosened tolerance vs f32 ref
    assert jnp.allclose(out_f32, ref, atol=5e-2, rtol=5e-2), max_err
    print("KERNEL_OK")
</pallas_src>

<mosaic_0001>
module attributes {stable_mosaic.version = 11 : i64} {
  func.func @_deconv_bn_relu_kernel(%arg0: i32, %arg1: i32, %arg2: memref<1x32x4096xbf16, #tpu.memory_space<vmem>>, %arg3: memref<64x32xbf16, #tpu.memory_space<vmem>>, %arg4: memref<64x1xf32, #tpu.memory_space<vmem>>, %arg5: memref<1x64x4096xbf16, #tpu.memory_space<vmem>>) attributes {dimension_semantics = [#tpu.dimension_semantics<parallel>, #tpu.dimension_semantics<parallel>], iteration_bounds = array<i64: 2, 1>, scalar_prefetch = 0 : i64, scratch_operands = 0 : i64, tpu.core_type = #tpu.core_type<tc>, window_params = [{transform_indices = @transform_0, window_bounds = array<i64: 1, 32, 4096>}, {pipeline_mode = #tpu.pipeline_mode<synchronous>, transform_indices = @transform_1, window_bounds = array<i64: 64, 32>}, {pipeline_mode = #tpu.pipeline_mode<synchronous>, transform_indices = @transform_2, window_bounds = array<i64: 64, 1>}, {transform_indices = @transform_3, window_bounds = array<i64: 1, 64, 4096>}]} {
    %c0 = arith.constant 0 : index
    %c0_0 = arith.constant 0 : index
    %0 = vector.load %arg3[%c0, %c0_0] : memref<64x32xbf16, #tpu.memory_space<vmem>>, vector<64x32xbf16>
    %c0_1 = arith.constant 0 : index
    %c0_2 = arith.constant 0 : index
    %c0_3 = arith.constant 0 : index
    %1 = vector.load %arg2[%c0_1, %c0_2, %c0_3] : memref<1x32x4096xbf16, #tpu.memory_space<vmem>>, vector<1x32x4096xbf16>
    %2 = vector.shape_cast %1 : vector<1x32x4096xbf16> to vector<32x4096xbf16>
    %cst = arith.constant dense<0.000000e+00> : vector<64x4096xf32>
    %3 = tpu.matmul %0, %2, %cst {dimension_numbers = #tpu.dot_dimension_numbers<[1], [0], [0], [1], [0, 0, 1, 1], [], []>} : vector<64x32xbf16>, vector<32x4096xbf16>, vector<64x4096xf32> -> vector<64x4096xf32>
    %c0_4 = arith.constant 0 : index
    %c0_5 = arith.constant 0 : index
    %4 = vector.load %arg4[%c0_4, %c0_5] : memref<64x1xf32, #tpu.memory_space<vmem>>, vector<64x1xf32>
    %5 = vector.broadcast %4 : vector<64x1xf32> to vector<64x4096xf32>
    %6 = arith.addf %3, %5 : vector<64x4096xf32>
    %cst_6 = arith.constant 0.000000e+00 : f32
    %7 = vector.broadcast %cst_6 : f32 to vector<64x4096xf32>
    %8 = arith.maximumf %6, %7 : vector<64x4096xf32>
    %9 = arith.truncf %8 : vector<64x4096xf32> to vector<64x4096xbf16>
    %c0_7 = arith.constant 0 : index
    %c0_8 = arith.constant 0 : index
    %c0_9 = arith.constant 0 : index
    %10 = vector.load %arg5[%c0_7, %c0_8, %c0_9] : memref<1x64x4096xbf16, #tpu.memory_space<vmem>>, vector<1x64x4096xbf16>
    %11 = vector.shape_cast %10 : vector<1x64x4096xbf16> to vector<64x4096xbf16>
    %12 = vector.shape_cast %9 : vector<64x4096xbf16> to vector<1x64x4096xbf16>
    tpu.vector_store %arg5[%c0_7, %c0_8, %c0_9], %12 {strides = array<i32>} : memref<1x64x4096xbf16, #tpu.memory_space<vmem>>, vector<1x64x4096xbf16>,
    return
  }
  func.func @transform_0(%arg0: i32, %arg1: i32) -> (i32, i32, i32) {
    %c0_i32 = arith.constant 0 : i32
    %c0_i32_0 = arith.constant 0 : i32
    return %arg0, %c0_i32, %arg1 : i32, i32, i32
  }
  func.func @transform_1(%arg0: i32, %arg1: i32) -> (i32, i32) {
    %c0_i32 = arith.constant 0 : i32
    %c0_i32_0 = arith.constant 0 : i32
    %c0_i32_1 = arith.constant 0 : i32
    return %c0_i32, %c0_i32_0 : i32, i32
  }
  func.func @transform_2(%arg0: i32, %arg1: i32) -> (i32, i32) {
    %c0_i32 = arith.constant 0 : i32
    %c0_i32_0 = arith.constant 0 : i32
    %c0_i32_1 = arith.constant 0 : i32
    return %c0_i32, %c0_i32_0 : i32, i32
  }
  func.func @transform_3(%arg0: i32, %arg1: i32) -> (i32, i32, i32) {
    %c0_i32 = arith.constant 0 : i32
    %c0_i32_0 = arith.constant 0 : i32
    return %arg0, %c0_i32, %arg1 : i32, i32, i32
  }
}

</mosaic_0001>

<llo_original>
// kernel: tpu_custom_call.1
$region0: #{tpu_custom_call.1}
  #allocation0 [shape = 'u32[]', space=smem, size = 0x4, offset = 0x4, fixed_abs, tag = 'smem constant byte address 0x4 - core index']
  #allocation1 [shape = 'u32[144,128]{1,0:T(1,128)}', space=vmem, size = 0x12000, scoped, tag = 'internal scratch']
  %s0 = inlined_call_operand.hbm [shape: bf16[2,32,4096], index: 0, kind: input, shape index: {}]
  %s1 = inlined_call_operand.vmem [shape: bf16[64,32], index: 1, kind: input, shape index: {}]
  %s2 = inlined_call_operand.vmem [shape: f32[64,1], index: 2, kind: input, shape index: {}]
  %s3 = inlined_call_operand.hbm [shape: bf16[2,64,4096], index: 3, kind: output, shape index: {}]
  %s4 = sld [smem:[#allocation0]]
  $region49: #{tpu_custom_call.1} parent=0
    _
  %s6 = ssub.s32 1, %s4
  %s7 = scalar_select 0, %s6, %s4
  $region1: #{tpu_custom_call.1} parent=0
    #allocation2 [shape = 'u8[524288]{0}', space=vmem, size = 0x80000, scoped, tag = 'input window, operand 0']
    #allocation3 [shape = 's32[2]{0}', space=sflag, size = 0x8, scoped, tag = 'scoped memory for tpu_custom_call.1']
    #allocation4 [shape = 's32[2]{0}', space=sflag, size = 0x8, scoped, tag = 'scoped memory for tpu_custom_call.1']
    #allocation5 [shape = 'u8[1048576]{0}', space=vmem, size = 0x100000, scoped, tag = 'output window, operand 0']
    %8 = vsyncpa [#allocation3], 0
    %s9 = scalar_lea.sflag [#allocation3], 1
    %10 = vsyncpa %s9, 0
    %11 = vsyncpa [#allocation4], 0
    %s12 = scalar_lea.sflag [#allocation4], 1
    %13 = vsyncpa %s12, 0
    loop: start=0, step=1, limit=4
    $region2: #{tpu_custom_call.1} parent=1 // loop_pre_header
      _
    $region3: #{tpu_custom_call.1} parent=1 // loop_header
      %s15 = sphi 0, %s19
      %p16 = scmp.ge.s32.totalorder %s15, 4
      %s22 = sphi 0, %s34
      %s23 = sphi 0, %s30
      %s24 = sphi 0, %s22
      %s25 = sphi 0, %s23
      %s26 = sphi 0, %s24
      %s27 = sphi 0, %s25
      %s39 = sphi 0, %s41
      %s42 = sphi 0, %s39
      %s43 = sphi 0, %s42
      %s59 = sphi 0, %s43
      %s63 = sphi 0, %s63
      %s65 = sphi 0, %s63
      %s66 = sphi 0, %s65
      %s80 = sphi 0, %s66
      %s84 = sphi 0, %s84
      %s86 = sphi 0, %s84
      %s87 = sphi 0, %s86
      %s101 = sphi 0, %s87
      %s109 = sphi 0, %s111
      %s112 = sphi 0, %s109
      %s113 = sphi 0, %s112
      %s129 = sphi 0, %s113
    $region4: #{tpu_custom_call.1} parent=1 // loop_header_branch
      %18 = sbr.rel (%p16) target = $region8
    $region5: #{tpu_custom_call.1} parent=1 // loop_body
      %s20 = ssub.s32 %s15, 1
      %s21 = ssub.s32 %s15, 2
      %s28 = sadd.s32 1, %s23
      %p29 = scmp.ge.s32.totalorder %s28, 1
      %s30 = scalar_select %p29, 0, %s28
      %s31 = sadd.s32 1, %s22
      %s32 = scalar_select %p29, %s31, %s22
      %p33 = scmp.ge.s32.totalorder %s32, 2
      %s34 = scalar_select %p33, 0, %s32
      %s35 = ssub.s32 %s22, %s34
      %s36 = ssub.s32 %s23, %s30
      %s37 = sor.u32 %s35, %s36
      %p38 = scmp.eq.s32.totalorder %s37, 0
      %s40 = sadd.s32 %s39, 1
      %s41 = scalar_select %p38, %s39, %s40
      %p44 = pneg %p38
      %p45 = scmp.eq.s32.totalorder %s15, 1
      %p46 = por %p44, %p45
      %p47 = scmp.ne.s32.totalorder %s39, %s42
      %p48 = scmp.eq.s32.totalorder %s15, 0
      %p49 = por %p47, %p48
      %p50 = scmp.ne.s32.totalorder %s39, %s42
      %p51 = scmp.eq.s32.totalorder %s20, 1
      %p52 = por %p50, %p51
      %p53 = scmp.ne.s32.totalorder %s42, %s43
      %p54 = scmp.eq.s32.totalorder %s20, 0
      %p55 = por %p53, %p54
      %p56 = scmp.ne.s32.totalorder %s42, %s43
      %p57 = scmp.eq.s32.totalorder %s21, 1
      %p58 = por %p56, %p57
      %p60 = scmp.ne.s32.totalorder %s43, %s59
      %p61 = scmp.eq.s32.totalorder %s21, 0
      %p62 = por %p60, %p61
      %s64 = sadd.s32 %s63, 1
      %p67 = scmp.eq.s32.totalorder %s15, 1
      %p68 = scmp.ne.s32.totalorder %s63, %s65
      %p69 = scmp.eq.s32.totalorder %s15, 0
      %p70 = por %p68, %p69
      %p71 = scmp.ne.s32.totalorder %s63, %s65
      %p72 = scmp.eq.s32.totalorder %s20, 1
      %p73 = por %p71, %p72
      %p74 = scmp.ne.s32.totalorder %s65, %s66
      %p75 = scmp.eq.s32.totalorder %s20, 0
      %p76 = por %p74, %p75
      %p77 = scmp.ne.s32.totalorder %s65, %s66
      %p78 = scmp.eq.s32.totalorder %s21, 1
      %p79 = por %p77, %p78
      %p81 = scmp.ne.s32.totalorder %s66, %s80
      %p82 = scmp.eq.s32.totalorder %s21, 0
      %p83 = por %p81, %p82
      %s85 = sadd.s32 %s84, 1
      %p88 = scmp.eq.s32.totalorder %s15, 1
      %p89 = scmp.ne.s32.totalorder %s84, %s86
      %p90 = scmp.eq.s32.totalorder %s15, 0
      %p91 = por %p89, %p90
      %p92 = scmp.ne.s32.totalorder %s84, %s86
      %p93 = scmp.eq.s32.totalorder %s20, 1
      %p94 = por %p92, %p93
      %p95 = scmp.ne.s32.totalorder %s86, %s87
      %p96 = scmp.eq.s32.totalorder %s20, 0
      %p97 = por %p95, %p96
      %p98 = scmp.ne.s32.totalorder %s86, %s87
      %p99 = scmp.eq.s32.totalorder %s21, 1
      %p100 = por %p98, %p99
      %p102 = scmp.ne.s32.totalorder %s87, %s101
      %p103 = scmp.eq.s32.totalorder %s21, 0
      %p104 = por %p102, %p103
      %s105 = ssub.s32 %s22, %s34
      %s106 = ssub.s32 %s23, %s30
      %s107 = sor.u32 %s105, %s106
      %p108 = scmp.eq.s32.totalorder %s107, 0
      %s110 = sadd.s32 %s109, 1
      %s111 = scalar_select %p108, %s109, %s110
      %p114 = pneg %p108
      %p115 = scmp.eq.s32.totalorder %s15, 1
      %p116 = por %p114, %p115
      %p117 = scmp.ne.s32.totalorder %s109, %s112
      %p118 = scmp.eq.s32.totalorder %s15, 0
      %p119 = por %p117, %p118
      %p120 = scmp.ne.s32.totalorder %s109, %s112
      %p121 = scmp.eq.s32.totalorder %s20, 1
      %p122 = por %p120, %p121
      %p123 = scmp.ne.s32.totalorder %s112, %s113
      %p124 = scmp.eq.s32.totalorder %s20, 0
      %p125 = por %p123, %p124
      %p126 = scmp.ne.s32.totalorder %s112, %s113
      %p127 = scmp.eq.s32.totalorder %s21, 1
      %p128 = por %p126, %p127
      %p130 = scmp.ne.s32.totalorder %s113, %s129
      %p131 = scmp.eq.s32.totalorder %s21, 0
      %p132 = por %p130, %p131
      %p133 = scmp.le.s32.totalorder 1, %s15
      %p134 = scmp.lt.s32.totalorder %s15, 3
      %p135 = pnand %p133, %p134
      %p136 = pneg %p135
      // Predicated region
      $region9: #{tpu_custom_call.1} parent=5 // pred_check
        _
      $region10: #{tpu_custom_call.1} parent=5 // pred_check_branch
        %138 = sbr.rel (%p135) target = $region12
      $region11: #{tpu_custom_call.1} parent=5 // pred_region
        %s139 = ssub.s32 %s15, 1
        // Predicated region
        $region13: #{tpu_custom_call.1} parent=11 // pred_check
          %p140 = pneg %p76
        $region14: #{tpu_custom_call.1} parent=11 // pred_check_branch
          %142 = sbr.rel (%p140) target = $region16
        $region15: #{tpu_custom_call.1} parent=11 // pred_region
          _
        $region16: #{tpu_custom_call.1} parent=11 // pred_fallthru
          _
        // Predicated region
        $region17: #{tpu_custom_call.1} parent=11 // pred_check
          %p143 = pneg %p97
        $region18: #{tpu_custom_call.1} parent=11 // pred_check_branch
          %145 = sbr.rel (%p143) target = $region20
        $region19: #{tpu_custom_call.1} parent=11 // pred_region
          _
        $region20: #{tpu_custom_call.1} parent=11 // pred_fallthru
          _
      $region12: #{tpu_custom_call.1} parent=5 // pred_fallthru
        _
      %p146 = scmp.lt.s32.totalorder %s15, 2
      // Predicated region
      $region21: #{tpu_custom_call.1} parent=5 // pred_check
        %p147 = pneg %p146
      $region22: #{tpu_custom_call.1} parent=5 // pred_check_branch
        %149 = sbr.rel (%p147) target = $region24
      $region23: #{tpu_custom_call.1} parent=5 // pred_region
        // Predicated region
        $region25: #{tpu_custom_call.1} parent=23 // pred_check
          %p150 = pneg %p49
        $region26: #{tpu_custom_call.1} parent=23 // pred_check_branch
          %152 = sbr.rel (%p150) target = $region28
        $region27: #{tpu_custom_call.1} parent=23 // pred_region
          %s153 = sand.u32 %s39, 1
          %s154 = scalar_lea.sflag [#allocation3], %s153
          %s155 = sand.u32 %s39, 1
          %s156 = smul.addr %s155, 512
          %s157 = scalar_lea.vmem [#allocation2], %s156
          %s158 = smul.u32 32, %s23
          %s160 = ssub.s32 8192, 8192
          %161 = vsyncadd %s154, %s160
          %s162 = smul.addr %s22, 128
          %s163 = sadd.s32 %s158, %s162
          %s164 = smul.addr %s163, 64
          %s165 = scalar_lea.hbm %s0, %s164
          %s166 = sshll.u32 %s157, 4
          %s167 = int_to_ptr.vmem [resolvable:$true] %s166
          %172 = dma.hbm_to_vmem [thread:$0]  %s165, 8192, %s167, %s154, 2048, 2048, 128
        $region28: #{tpu_custom_call.1} parent=23 // pred_fallthru
          _
      $region24: #{tpu_custom_call.1} parent=5 // pred_fallthru
        _
      %p173 = scmp.le.s32.totalorder 1, %s15
      %p174 = scmp.lt.s32.totalorder %s15, 3
      %p175 = pnand %p173, %p174
      %p176 = pneg %p175
      // Predicated region
      $region29: #{tpu_custom_call.1} parent=5 // pred_check
        _
      $region30: #{tpu_custom_call.1} parent=5 // pred_check_branch
        %178 = sbr.rel (%p175) target = $region32
      $region31: #{tpu_custom_call.1} parent=5 // pred_region
        %s179 = ssub.s32 %s15, 1
        %s180 = sand.u32 %s42, 1
        %s181 = scalar_lea.sflag [#allocation3], %s180
        %s182 = sand.u32 %s42, 1
        %s183 = smul.addr %s182, 512
        %s184 = scalar_lea.vmem [#allocation2], %s183
        // Predicated region
        $region33: #{tpu_custom_call.1} parent=31 // pred_check
          %p185 = pneg %p55
        $region34: #{tpu_custom_call.1} parent=31 // pred_check_branch
          %187 = sbr.rel (%p185) target = $region36
        $region35: #{tpu_custom_call.1} parent=31 // pred_region
          %188 = dma.done %s181, 8192
        $region36: #{tpu_custom_call.1} parent=31 // pred_fallthru
          _
        %s189 = sand.u32 %s42, 1
        %s190 = scalar_lea.sflag [#allocation3], %s189
        %s191 = sand.u32 %s42, 1
        %s192 = smul.addr %s191, 512
        %s193 = scalar_lea.vmem [#allocation2], %s192
        %p194 = pneg %p55
        %p195 = pneg %p52
        %p196 = pneg %p76
        %p197 = pneg %p73
        %p198 = pneg %p97
        %p199 = pneg %p94
        %p200 = pneg %p125
        %p201 = pneg %p122
        %s202 = sand.u32 %s112, 1
        %s203 = scalar_lea.sflag [#allocation4], %s202
        %s204 = sand.u32 %s112, 1
        %s205 = smul.addr %s204, 1024
        %s206 = scalar_lea.vmem [#allocation5], %s205
        %s207 = smul.u32 32, %s25
        %s208 = smul.u32 32, %s25
        %v210 = vld [vmem:[%s1] sm:$0xf]
        %v211 = vld [vmem:[%s1 + $0x4] sm:$0xf]
        %v212 = vld [vmem:[%s1 + $0x8] sm:$0xf]
        %v213 = vld [vmem:[%s1 + $0xc] sm:$0xf]
        %v214 = vld [vmem:[%s1 + $0x10] sm:$0xf]
        %v215 = vld [vmem:[%s1 + $0x14] sm:$0xf]
        %v216 = vld [vmem:[%s1 + $0x18] sm:$0xf]
        %v217 = vld [vmem:[%s1 + $0x1c] sm:$0xf]
        %v218 = vld [vmem:[%s184] sm:$0xff]
        %v219 = vld [vmem:[%s184 + $0x8] sm:$0xff]
        %v220 = vld [vmem:[%s184 + $0x10] sm:$0xff]
        %v221 = vld [vmem:[%s184 + $0x18] sm:$0xff]
        %v222 = vld [vmem:[%s184 + $0x20] sm:$0xff]
        %v223 = vld [vmem:[%s184 + $0x28] sm:$0xff]
        %v224 = vld [vmem:[%s184 + $0x30] sm:$0xff]
        %v225 = vld [vmem:[%s184 + $0x38] sm:$0xff]
        %v226 = vld [vmem:[%s184 + $0x40] sm:$0xff]
        %v227 = vld [vmem:[%s184 + $0x48] sm:$0xff]
        %v228 = vld [vmem:[%s184 + $0x50] sm:$0xff]
        %v229 = vld [vmem:[%s184 + $0x58] sm:$0xff]
        %v230 = vld [vmem:[%s184 + $0x60] sm:$0xff]
        %v231 = vld [vmem:[%s184 + $0x68] sm:$0xff]
        %v232 = vld [vmem:[%s184 + $0x70] sm:$0xff]
        %v233 = vld [vmem:[%s184 + $0x78] sm:$0xff]
        %v234 = vld [vmem:[%s184 + $0x80] sm:$0xff]
        %v235 = vld [vmem:[%s184 + $0x88] sm:$0xff]
        %v236 = vld [vmem:[%s184 + $0x90] sm:$0xff]
        %v237 = vld [vmem:[%s184 + $0x98] sm:$0xff]
        %v238 = vld [vmem:[%s184 + $0xa0] sm:$0xff]
        %v239 = vld [vmem:[%s184 + $0xa8] sm:$0xff]
        %v240 = vld [vmem:[%s184 + $0xb0] sm:$0xff]
        %v241 = vld [vmem:[%s184 + $0xb8] sm:$0xff]
        %v242 = vld [vmem:[%s184 + $0xc0] sm:$0xff]
        %v243 = vld [vmem:[%s184 + $0xc8] sm:$0xff]
        %v244 = vld [vmem:[%s184 + $0xd0] sm:$0xff]
        %v245 = vld [vmem:[%s184 + $0xd8] sm:$0xff]
        %v246 = vld [vmem:[%s184 + $0xe0] sm:$0xff]
        %v247 = vld [vmem:[%s184 + $0xe8] sm:$0xff]
        %v248 = vld [vmem:[%s184 + $0xf0] sm:$0xff]
        %v249 = vld [vmem:[%s184 + $0xf8] sm:$0xff]
        %v250 = vld [vmem:[%s184 + $0x100] sm:$0xff]
        %v251 = vld [vmem:[%s184 + $0x108] sm:$0xff]
        %v252 = vld [vmem:[%s184 + $0x110] sm:$0xff]
        %v253 = vld [vmem:[%s184 + $0x118] sm:$0xff]
        %v254 = vld [vmem:[%s184 + $0x120] sm:$0xff]
        %v255 = vld [vmem:[%s184 + $0x128] sm:$0xff]
        %v256 = vld [vmem:[%s184 + $0x130] sm:$0xff]
        %v257 = vld [vmem:[%s184 + $0x138] sm:$0xff]
        %v258 = vld [vmem:[%s184 + $0x140] sm:$0xff]
        %v259 = vld [vmem:[%s184 + $0x148] sm:$0xff]
        %v260 = vld [vmem:[%s184 + $0x150] sm:$0xff]
        %v261 = vld [vmem:[%s184 + $0x158] sm:$0xff]
        %v262 = vld [vmem:[%s184 + $0x160] sm:$0xff]
        %v263 = vld [vmem:[%s184 + $0x168] sm:$0xff]
        %v264 = vld [vmem:[%s184 + $0x170] sm:$0xff]
        %v265 = vld [vmem:[%s184 + $0x178] sm:$0xff]
        %v266 = vld [vmem:[%s184 + $0x180] sm:$0xff]
        %v267 = vld [vmem:[%s184 + $0x188] sm:$0xff]
        %v268 = vld [vmem:[%s184 + $0x190] sm:$0xff]
        %v269 = vld [vmem:[%s184 + $0x198] sm:$0xff]
        %v270 = vld [vmem:[%s184 + $0x1a0] sm:$0xff]
        %v271 = vld [vmem:[%s184 + $0x1a8] sm:$0xff]
        %v272 = vld [vmem:[%s184 + $0x1b0] sm:$0xff]
        %v273 = vld [vmem:[%s184 + $0x1b8] sm:$0xff]
        %v274 = vld [vmem:[%s184 + $0x1c0] sm:$0xff]
        %v275 = vld [vmem:[%s184 + $0x1c8] sm:$0xff]
        %v276 = vld [vmem:[%s184 + $0x1d0] sm:$0xff]
        %v277 = vld [vmem:[%s184 + $0x1d8] sm:$0xff]
        %v278 = vld [vmem:[%s184 + $0x1e0] sm:$0xff]
        %v279 = vld [vmem:[%s184 + $0x1e8] sm:$0xff]
        %v280 = vld [vmem:[%s184 + $0x1f0] sm:$0xff]
        %v281 = vld [vmem:[%s184 + $0x1f8] sm:$0xff]
        %v282 = vld [vmem:[%s2] sm:$0xff]
        %v283 = vld [vmem:[%s2 + $0x8] sm:$0xff]
        %v284 = vld [vmem:[%s2 + $0x10] sm:$0xff]
        %v285 = vld [vmem:[%s2 + $0x18] sm:$0xff]
        %v286 = vld [vmem:[%s2 + $0x20] sm:$0xff]
        %v287 = vld [vmem:[%s2 + $0x28] sm:$0xff]
        %v288 = vld [vmem:[%s2 + $0x30] sm:$0xff]
        %v289 = vld [vmem:[%s2 + $0x38] sm:$0xff]
        %291 = vset.pattern.permute.xlu0 0
        %292 = vperm.xlu0 %291, %v282
        %v293 = vpop.permute.xlu0 %292
        %296 = vset.pattern.permute.xlu0 0
        %297 = vperm.xlu0 %296, %v283
        %v298 = vpop.permute.xlu0 %297
        %301 = vset.pattern.permute.xlu0 0
        %302 = vperm.xlu0 %301, %v284
        %v303 = vpop.permute.xlu0 %302
        %306 = vset.pattern.permute.xlu0 0
        %307 = vperm.xlu0 %306, %v285
        %v308 = vpop.permute.xlu0 %307
        %311 = vset.pattern.permute.xlu0 0
        %312 = vperm.xlu0 %311, %v286
        %v313 = vpop.permute.xlu0 %312
        %316 = vset.pattern.permute.xlu0 0
        %317 = vperm.xlu0 %316, %v287
        %v318 = vpop.permute.xlu0 %317
        %321 = vset.pattern.permute.xlu0 0
        %322 = vperm.xlu0 %321, %v288
        %v323 = vpop.permute.xlu0 %322
        %326 = vset.pattern.permute.xlu0 0
        %327 = vperm.xlu0 %326, %v289
        %v328 = vpop.permute.xlu0 %327
        %v338 = vunpack.c.l.b16 %v210
        %v339 = vunpack.c.l.b16 %v211
        %v340 = vunpack.c.l.b16 %v212
        %v341 = vunpack.c.l.b16 %v213
        %v342 = vunpack.c.l.b16 %v214
        %v343 = vunpack.c.l.b16 %v215
        %v344 = vunpack.c.l.b16 %v216
        %v345 = vunpack.c.l.b16 %v217
        %v346 = vpack.c.b16 %v339, %v338
        %v347 = vpack.c.b16 %v341, %v340
        %v348 = vpack.c.b16 %v343, %v342
        %v349 = vpack.c.b16 %v345, %v344
        %v414 = vunpack.c.l.b16 %v218
        %v415 = vunpack.c.h.b16 %v218
        %v416 = vunpack.c.l.b16 %v219
        %v417 = vunpack.c.h.b16 %v219
        %v418 = vunpack.c.l.b16 %v220
        %v419 = vunpack.c.h.b16 %v220
        %v420 = vunpack.c.l.b16 %v221
        %v421 = vunpack.c.h.b16 %v221
        %v422 = vunpack.c.l.b16 %v222
        %v423 = vunpack.c.h.b16 %v222
        %v424 = vunpack.c.l.b16 %v223
        %v425 = vunpack.c.h.b16 %v223
        %v426 = vunpack.c.l.b16 %v224
        %v427 = vunpack.c.h.b16 %v224
        %v428 = vunpack.c.l.b16 %v225
        %v429 = vunpack.c.h.b16 %v225
        %v430 = vunpack.c.l.b16 %v226
        %v431 = vunpack.c.h.b16 %v226
        %v432 = vunpack.c.l.b16 %v227
        %v433 = vunpack.c.h.b16 %v227
        %v434 = vunpack.c.l.b16 %v228
        %v435 = vunpack.c.h.b16 %v228
        %v436 = vunpack.c.l.b16 %v229
        %v437 = vunpack.c.h.b16 %v229
        %v438 = vunpack.c.l.b16 %v230
        %v439 = vunpack.c.h.b16 %v230
        %v440 = vunpack.c.l.b16 %v231
        %v441 = vunpack.c.h.b16 %v231
        %v442 = vunpack.c.l.b16 %v232
        %v443 = vunpack.c.h.b16 %v232
        %v444 = vunpack.c.l.b16 %v233
        %v445 = vunpack.c.h.b16 %v233
        %v446 = vunpack.c.l.b16 %v234
        %v447 = vunpack.c.h.b16 %v234
        %v448 = vunpack.c.l.b16 %v235
        %v449 = vunpack.c.h.b16 %v235
        %v450 = vunpack.c.l.b16 %v236
        %v451 = vunpack.c.h.b16 %v236
        %v452 = vunpack.c.l.b16 %v237
        %v453 = vunpack.c.h.b16 %v237
        %v454 = vunpack.c.l.b16 %v238
        %v455 = vunpack.c.h.b16 %v238
        %v456 = vunpack.c.l.b16 %v239
        %v457 = vunpack.c.h.b16 %v239
        %v458 = vunpack.c.l.b16 %v240
        %v459 = vunpack.c.h.b16 %v240
        %v460 = vunpack.c.l.b16 %v241
        %v461 = vunpack.c.h.b16 %v241
        %v462 = vunpack.c.l.b16 %v242
        %v463 = vunpack.c.h.b16 %v242
        %v464 = vunpack.c.l.b16 %v243
        %v465 = vunpack.c.h.b16 %v243
        %v466 = vunpack.c.l.b16 %v244
        %v467 = vunpack.c.h.b16 %v244
        %v468 = vunpack.c.l.b16 %v245
        %v469 = vunpack.c.h.b16 %v245
        %v470 = vunpack.c.l.b16 %v246
        %v471 = vunpack.c.h.b16 %v246
        %v472 = vunpack.c.l.b16 %v247
        %v473 = vunpack.c.h.b16 %v247
        %v474 = vunpack.c.l.b16 %v248
        %v475 = vunpack.c.h.b16 %v248
        %v476 = vunpack.c.l.b16 %v249
        %v477 = vunpack.c.h.b16 %v249
        %v478 = vunpack.c.l.b16 %v250
        %v479 = vunpack.c.h.b16 %v250
        %v480 = vunpack.c.l.b16 %v251
        %v481 = vunpack.c.h.b16 %v251
        %v482 = vunpack.c.l.b16 %v252
        %v483 = vunpack.c.h.b16 %v252
        %v484 = vunpack.c.l.b16 %v253
        %v485 = vunpack.c.h.b16 %v253
        %v486 = vunpack.c.l.b16 %v254
        %v487 = vunpack.c.h.b16 %v254
        %v488 = vunpack.c.l.b16 %v255
        %v489 = vunpack.c.h.b16 %v255
        %v490 = vunpack.c.l.b16 %v256
        %v491 = vunpack.c.h.b16 %v256
        %v492 = vunpack.c.l.b16 %v257
        %v493 = vunpack.c.h.b16 %v257
        %v494 = vunpack.c.l.b16 %v258
        %v495 = vunpack.c.h.b16 %v258
        %v496 = vunpack.c.l.b16 %v259
        %v497 = vunpack.c.h.b16 %v259
        %v498 = vunpack.c.l.b16 %v260
        %v499 = vunpack.c.h.b16 %v260
        %v500 = vunpack.c.l.b16 %v261
        %v501 = vunpack.c.h.b16 %v261
        %v502 = vunpack.c.l.b16 %v262
        %v503 = vunpack.c.h.b16 %v262
        %v504 = vunpack.c.l.b16 %v263
        %v505 = vunpack.c.h.b16 %v263
        %v506 = vunpack.c.l.b16 %v264
        %v507 = vunpack.c.h.b16 %v264
        %v508 = vunpack.c.l.b16 %v265
        %v509 = vunpack.c.h.b16 %v265
        %v510 = vunpack.c.l.b16 %v266
        %v511 = vunpack.c.h.b16 %v266
        %v512 = vunpack.c.l.b16 %v267
        %v513 = vunpack.c.h.b16 %v267
        %v514 = vunpack.c.l.b16 %v268
        %v515 = vunpack.c.h.b16 %v268
        %v516 = vunpack.c.l.b16 %v269
        %v517 = vunpack.c.h.b16 %v269
        %v518 = vunpack.c.l.b16 %v270
        %v519 = vunpack.c.h.b16 %v270
        %v520 = vunpack.c.l.b16 %v271
        %v521 = vunpack.c.h.b16 %v271
        %v522 = vunpack.c.l.b16 %v272
        %v523 = vunpack.c.h.b16 %v272
        %v524 = vunpack.c.l.b16 %v273
        %v525 = vunpack.c.h.b16 %v273
        %v526 = vunpack.c.l.b16 %v274
        %v527 = vunpack.c.h.b16 %v274
        %v528 = vunpack.c.l.b16 %v275
        %v529 = vunpack.c.h.b16 %v275
        %v530 = vunpack.c.l.b16 %v276
        %v531 = vunpack.c.h.b16 %v276
        %v532 = vunpack.c.l.b16 %v277
        %v533 = vunpack.c.h.b16 %v277
        %v534 = vunpack.c.l.b16 %v278
        %v535 = vunpack.c.h.b16 %v278
        %v536 = vunpack.c.l.b16 %v279
        %v537 = vunpack.c.h.b16 %v279
        %v538 = vunpack.c.l.b16 %v280
        %v539 = vunpack.c.h.b16 %v280
        %v540 = vunpack.c.l.b16 %v281
        %v541 = vunpack.c.h.b16 %v281
        %v542 = vpack.c.b16 %v446, %v414
        %v543 = vpack.c.b16 %v447, %v415
        %v544 = vpack.c.b16 %v448, %v416
        %v545 = vpack.c.b16 %v449, %v417
        %v546 = vpack.c.b16 %v450, %v418
        %v547 = vpack.c.b16 %v451, %v419
        %v548 = vpack.c.b16 %v452, %v420
        %v549 = vpack.c.b16 %v453, %v421
        %v550 = vpack.c.b16 %v454, %v422
        %v551 = vpack.c.b16 %v455, %v423
        %v552 = vpack.c.b16 %v456, %v424
        %v553 = vpack.c.b16 %v457, %v425
        %v554 = vpack.c.b16 %v458, %v426
        %v555 = vpack.c.b16 %v459, %v427
        %v556 = vpack.c.b16 %v460, %v428
        %v557 = vpack.c.b16 %v461, %v429
        %v558 = vpack.c.b16 %v462, %v430
        %v559 = vpack.c.b16 %v463, %v431
        %v560 = vpack.c.b16 %v464, %v432
        %v561 = vpack.c.b16 %v465, %v433
        %v562 = vpack.c.b16 %v466, %v434
        %v563 = vpack.c.b16 %v467, %v435
        %v564 = vpack.c.b16 %v468, %v436
        %v565 = vpack.c.b16 %v469, %v437
        %v566 = vpack.c.b16 %v470, %v438
        %v567 = vpack.c.b16 %v471, %v439
        %v568 = vpack.c.b16 %v472, %v440
        %v569 = vpack.c.b16 %v473, %v441
        %v570 = vpack.c.b16 %v474, %v442
        %v571 = vpack.c.b16 %v475, %v443
        %v572 = vpack.c.b16 %v476, %v444
        %v573 = vpack.c.b16 %v477, %v445
        %v574 = vpack.c.b16 %v510, %v478
        %v575 = vpack.c.b16 %v511, %v479
        %v576 = vpack.c.b16 %v512, %v480
        %v577 = vpack.c.b16 %v513, %v481
        %v578 = vpack.c.b16 %v514, %v482
        %v579 = vpack.c.b16 %v515, %v483
        %v580 = vpack.c.b16 %v516, %v484
        %v581 = vpack.c.b16 %v517, %v485
        %v582 = vpack.c.b16 %v518, %v486
        %v583 = vpack.c.b16 %v519, %v487
        %v584 = vpack.c.b16 %v520, %v488
        %v585 = vpack.c.b16 %v521, %v489
        %v586 = vpack.c.b16 %v522, %v490
        %v587 = vpack.c.b16 %v523, %v491
        %v588 = vpack.c.b16 %v524, %v492
        %v589 = vpack.c.b16 %v525, %v493
        %v590 = vpack.c.b16 %v526, %v494
        %v591 = vpack.c.b16 %v527, %v495
        %v592 = vpack.c.b16 %v528, %v496
        %v593 = vpack.c.b16 %v529, %v497
        %v594 = vpack.c.b16 %v530, %v498
        %v595 = vpack.c.b16 %v531, %v499
        %v596 = vpack.c.b16 %v532, %v500
        %v597 = vpack.c.b16 %v533, %v501
        %v598 = vpack.c.b16 %v534, %v502
        %v599 = vpack.c.b16 %v535, %v503
        %v600 = vpack.c.b16 %v536, %v504
        %v601 = vpack.c.b16 %v537, %v505
        %v602 = vpack.c.b16 %v538, %v506
        %v603 = vpack.c.b16 %v539, %v507
        %v604 = vpack.c.b16 %v540, %v508
        %v605 = vpack.c.b16 %v541, %v509
        %vm670 = vcmask 261120
        %v672 = vsel %vm670, %v346, 0
        %v675 = vsel %vm670, %v347, 0
        %v678 = vsel %vm670, %v348, 0
        %v681 = vsel %vm670, %v349, 0
        %683 = vmatprep.subr.bf16.mxu0 %v543
        %684 = vmatpush1.bf16.msra.mxu0 %v542
        %685 = vmatprep.subr.bf16.mxu0 %v575
        %686 = vmatpush1.bf16.msra.mxu0 %v574
        %687 = vmatprep.subr.bf16.mxu0 0
        %688 = vmatpush1.bf16.msra.mxu0 0
        %689 = vmatprep.subr.bf16.mxu0 0
        %690 = vmatpush1.bf16.msra.mxu0 0
        %691 = vmatprep.subr.bf16.mxu0 0
        %692 = vmatpush1.bf16.msra.mxu0 0
        %693 = vmatprep.subr.bf16.mxu0 0
        %694 = vmatpush1.bf16.msra.mxu0 0
        %695 = vmatprep.subr.bf16.mxu0 0
        %696 = vmatpush1.bf16.msra.mxu0 0
        %697 = vmatprep.subr.bf16.mxu0 0
        %698 = vmatpush1.bf16.msra.mxu0 0
        %699 = vmatprep.subr.bf16.mxu0 0
        %700 = vmatpush1.bf16.msra.mxu0 0
        %701 = vmatprep.subr.bf16.mxu0 0
        %702 = vmatpush1.bf16.msra.mxu0 0
        %703 = vmatprep.subr.bf16.mxu0 0
        %704 = vmatpush1.bf16.msra.mxu0 0
        %705 = vmatprep.subr.bf16.mxu0 0
        %706 = vmatpush1.bf16.msra.mxu0 0
        %707 = vmatprep.subr.bf16.mxu0 0
        %708 = vmatpush1.bf16.msra.mxu0 0
        %709 = vmatprep.subr.bf16.mxu0 0
        %710 = vmatpush1.bf16.msra.mxu0 0
        %711 = vmatprep.subr.bf16.mxu0 0
        %712 = vmatpush1.bf16.msra.mxu0 0
        %713 = vmatprep.subr.bf16.mxu0 0
        %714 = vmatpush1.bf16.msra.mxu0 0
        %715 = vmatprep.mubr.bf16.mxu0 0
        %716 = vmatmul.mubr.bf16.gmra.mrb[0].mxu0 %v672
        %v717 = vpop.f32.mrb[0].mxu0
        %v718 = vadd.f32 %v293, %v717
        %v719 = vpop.f32.mrb[0].mxu0
        %v720 = vadd.f32 %v293, %v719
        %v721 = vpop.f32.mrb[0].mxu0
        %v722 = vadd.f32 %v298, %v721
        %v723 = vpop.f32.mrb[0].mxu0
        %v724 = vadd.f32 %v298, %v723
        %725 = vmatprep.mubr.bf16.mxu0 0
        %726 = vmatmul.mubr.bf16.gmra.mrb[0].mxu0 %v675
        %v727 = vpop.f32.mrb[0].mxu0
        %v728 = vadd.f32 %v303, %v727
        %v729 = vpop.f32.mrb[0].mxu0
        %v730 = vadd.f32 %v303, %v729
        %v731 = vpop.f32.mrb[0].mxu0
        %v732 = vadd.f32 %v308, %v731
        %v733 = vpop.f32.mrb[0].mxu0
        %v734 = vadd.f32 %v308, %v733
        %735 = vmatprep.mubr.bf16.mxu0 0
        %736 = vmatmul.mubr.bf16.gmra.mrb[0].mxu0 %v678
        %v737 = vpop.f32.mrb[0].mxu0
        %v738 = vadd.f32 %v313, %v737
        %v739 = vpop.f32.mrb[0].mxu0
        %v740 = vadd.f32 %v313, %v739
        %v741 = vpop.f32.mrb[0].mxu0
        %v742 = vadd.f32 %v318, %v741
        %v743 = vpop.f32.mrb[0].mxu0
        %v744 = vadd.f32 %v318, %v743
        %745 = vmatprep.mubr.bf16.mxu0 0
        %746 = vmatmul.mubr.bf16.gmra.mrb[0].mxu0 %v681
        %v747 = vpop.f32.mrb[0].mxu0
        %v748 = vadd.f32 %v323, %v747
        %v749 = vpop.f32.mrb[0].mxu0
        %v750 = vadd.f32 %v323, %v749
        %v751 = vpop.f32.mrb[0].mxu0
        %v752 = vadd.f32 %v328, %v751
        %v753 = vpop.f32.mrb[0].mxu0
        %v754 = vadd.f32 %v328, %v753
        %755 = vdwg.mxu0
        %756 = vmatprep.subr.bf16.mxu0 %v545
        %757 = vmatpush1.bf16.msra.mxu0 %v544
        %758 = vmatprep.subr.bf16.mxu0 %v577
        %759 = vmatpush1.bf16.msra.mxu0 %v576
        %760 = vmatprep.subr.bf16.mxu0 0
        %761 = vmatpush1.bf16.msra.mxu0 0
        %762 = vmatprep.subr.bf16.mxu0 0
        %763 = vmatpush1.bf16.msra.mxu0 0
        %764 = vmatprep.subr.bf16.mxu0 0
        %765 = vmatpush1.bf16.msra.mxu0 0
        %766 = vmatprep.subr.bf16.mxu0 0
        %767 = vmatpush1.bf16.msra.mxu0 0
        %768 = vmatprep.subr.bf16.mxu0 0
        %769 = vmatpush1.bf16.msra.mxu0 0
        %770 = vmatprep.subr.bf16.mxu0 0
        %771 = vmatpush1.bf16.msra.mxu0 0
        %772 = vmatprep.subr.bf16.mxu0 0
        %773 = vmatpush1.bf16.msra.mxu0 0
        %774 = vmatprep.subr.bf16.mxu0 0
        %775 = vmatpush1.bf16.msra.mxu0 0
        %776 = vmatprep.subr.bf16.mxu0 0
        %777 = vmatpush1.bf16.msra.mxu0 0
        %778 = vmatprep.subr.bf16.mxu0 0
        %779 = vmatpush1.bf16.msra.mxu0 0
        %780 = vmatprep.subr.bf16.mxu0 0
        %781 = vmatpush1.bf16.msra.mxu0 0
        %782 = vmatprep.subr.bf16.mxu0 0
        %783 = vmatpush1.bf16.msra.mxu0 0
        %784 = vmatprep.subr.bf16.mxu0 0
        %785 = vmatpush1.bf16.msra.mxu0 0
        %786 = vmatprep.subr.bf16.mxu0 0
        %787 = vmatpush1.bf16.msra.mxu0 0
        %788 = vmatprep.mubr.bf16.mxu0 0
        %789 = vmatmul.mubr.bf16.gmra.mrb[0].mxu0 %v672
        %v790 = vpop.f32.mrb[0].mxu0
        %v791 = vadd.f32 %v293, %v790
        %v792 = vpop.f32.mrb[0].mxu0
        %v793 = vadd.f32 %v293, %v792
        %v794 = vpop.f32.mrb[0].mxu0
        %v795 = vadd.f32 %v298, %v794
        %v796 = vpop.f32.mrb[0].mxu0
        %v797 = vadd.f32 %v298, %v796
        %798 = vmatprep.mubr.bf16.mxu0 0
        %799 = vmatmul.mubr.bf16.gmra.mrb[0].mxu0 %v675
        %v800 = vpop.f32.mrb[0].mxu0
        %v801 = vadd.f32 %v303, %v800
        %v802 = vpop.f32.mrb[0].mxu0
        %v803 = vadd.f32 %v303, %v802
        %v804 = vpop.f32.mrb[0].mxu0
        %v805 = vadd.f32 %v308, %v804
        %v806 = vpop.f32.mrb[0].mxu0
        %v807 = vadd.f32 %v308, %v806
        %808 = vmatprep.mubr.bf16.mxu0 0
        %809 = vmatmul.mubr.bf16.gmra.mrb[0].mxu0 %v678
        %v810 = vpop.f32.mrb[0].mxu0
        %v811 = vadd.f32 %v313, %v810
        %v812 = vpop.f32.mrb[0].mxu0
        %v813 = vadd.f32 %v313, %v812
        %v814 = vpop.f32.mrb[0].mxu0
        %v815 = vadd.f32 %v318, %v814
        %v816 = vpop.f32.mrb[0].mxu0
        %v817 = vadd.f32 %v318, %v816
        %818 = vmatprep.mubr.bf16.mxu0 0
        %819 = vmatmul.mubr.bf16.gmra.mrb[0].mxu0 %v681
        %v820 = vpop.f32.mrb[0].mxu0
        %v821 = vadd.f32 %v323, %v820
        %v822 = vpop.f32.mrb[0].mxu0
        %v823 = vadd.f32 %v323, %v822
        %v824 = vpop.f32.mrb[0].mxu0
        %v825 = vadd.f32 %v328, %v824
        %v826 = vpop.f32.mrb[0].mxu0
        %v827 = vadd.f32 %v328, %v826
        %828 = vdwg.mxu0
        %829 = vmatprep.subr.bf16.mxu0 %v547
        %830 = vmatpush1.bf16.msra.mxu0 %v546
        %831 = vmatprep.subr.bf16.mxu0 %v579
        %832 = vmatpush1.bf16.msra.mxu0 %v578
        %833 = vmatprep.subr.bf16.mxu0 0
        %834 = vmatpush1.bf16.msra.mxu0 0
        %835 = vmatprep.subr.bf16.mxu0 0
        %836 = vmatpush1.bf16.msra.mxu0 0
        %837 = vmatprep.subr.bf16.mxu0 0
        %838 = vmatpush1.bf16.msra.mxu0 0
        %839 = vmatprep.subr.bf16.mxu0 0
        %840 = vmatpush1.bf16.msra.mxu0 0
        %841 = vmatprep.subr.bf16.mxu0 0
        %842 = vmatpush1.bf16.msra.mxu0 0
        %843 = vmatprep.subr.bf16.mxu0 0
        %844 = vmatpush1.bf16.msra.mxu0 0
        %845 = vmatprep.subr.bf16.mxu0 0
        %846 = vmatpush1.bf16.msra.mxu0 0
        %847 = vmatprep.subr.bf16.mxu0 0
        %848 = vmatpush1.bf16.msra.mxu0 0
        %849 = vmatprep.subr.bf16.mxu0 0
        %850 = vmatpush1.bf16.msra.mxu0 0
        %851 = vmatprep.subr.bf16.mxu0 0
        %852 = vmatpush1.bf16.msra.mxu0 0
        %853 = vmatprep.subr.bf16.mxu0 0
        %854 = vmatpush1.bf16.msra.mxu0 0
        %855 = vmatprep.subr.bf16.mxu0 0
        %856 = vmatpush1.bf16.msra.mxu0 0
        %857 = vmatprep.subr.bf16.mxu0 0
        %858 = vmatpush1.bf16.msra.mxu0 0
        %859 = vmatprep.subr.bf16.mxu0 0
        %860 = vmatpush1.bf16.msra.mxu0 0
        %861 = vmatprep.mubr.bf16.mxu0 0
        %862 = vmatmul.mubr.bf16.gmra.mrb[0].mxu0 %v672
        %v863 = vpop.f32.mrb[0].mxu0
        %v864 = vadd.f32 %v293, %v863
        %v865 = vpop.f32.mrb[0].mxu0
        %v866 = vadd.f32 %v293, %v865
        %v867 = vpop.f32.mrb[0].mxu0
        %v868 = vadd.f32 %v298, %v867
        %v869 = vpop.f32.mrb[0].mxu0
        %v870 = vadd.f32 %v298, %v869
        %871 = vmatprep.mubr.bf16.mxu0 0
        %872 = vmatmul.mubr.bf16.gmra.mrb[0].mxu0 %v675
        %v873 = vpop.f32.mrb[0].mxu0
        %v874 = vadd.f32 %v303, %v873
        %v875 = vpop.f32.mrb[0].mxu0
        %v876 = vadd.f32 %v303, %v875
        %v877 = vpop.f32.mrb[0].mxu0
        %v878 = vadd.f32 %v308, %v877
        %v879 = vpop.f32.mrb[0].mxu0
        %v880 = vadd.f32 %v308, %v879
        %881 = vmatprep.mubr.bf16.mxu0 0
        %882 = vmatmul.mubr.bf16.gmra.mrb[0].mxu0 %v678
        %v883 = vpop.f32.mrb[0].mxu0
        %v884 = vadd.f32 %v313, %v883
        %v885 = vpop.f32.mrb[0].mxu0
        %v886 = vadd.f32 %v313, %v885
        %v887 = vpop.f32.mrb[0].mxu0
        %v888 = vadd.f32 %v318, %v887
        %v889 = vpop.f32.mrb[0].mxu0
        %v890 = vadd.f32 %v318, %v889
        %891 = vmatprep.mubr.bf16.mxu0 0
        %892 = vmatmul.mubr.bf16.gmra.mrb[0].mxu0 %v681
        %v893 = vpop.f32.mrb[0].mxu0
        %v894 = vadd.f32 %v323, %v893
        %v895 = vpop.f32.mrb[0].mxu0
        %v896 = vadd.f32 %v323, %v895
        %v897 = vpop.f32.mrb[0].mxu0
        %v898 = vadd.f32 %v328, %v897
        %v899 = vpop.f32.mrb[0].mxu0
        %v900 = vadd.f32 %v328, %v899
        %901 = vdwg.mxu0
        %902 = vmatprep.subr.bf16.mxu0 %v549
        %903 = vmatpush1.bf16.msra.mxu0 %v548
        %904 = vmatprep.subr.bf16.mxu0 %v581
        %905 = vmatpush1.bf16.msra.mxu0 %v580
        %906 = vmatprep.subr.bf16.mxu0 0
        %907 = vmatpush1.bf16.msra.mxu0 0
        %908 = vmatprep.subr.bf16.mxu0 0
        %909 = vmatpush1.bf16.msra.mxu0 0
        %910 = vmatprep.subr.bf16.mxu0 0
        %911 = vmatpush1.bf16.msra.mxu0 0
        %912 = vmatprep.subr.bf16.mxu0 0
        %913 = vmatpush1.bf16.msra.mxu0 0
        %914 = vmatprep.subr.bf16.mxu0 0
        %915 = vmatpush1.bf16.msra.mxu0 0
        %916 = vmatprep.subr.bf16.mxu0 0
        %917 = vmatpush1.bf16.msra.mxu0 0
        %918 = vmatprep.subr.bf16.mxu0 0
        %919 = vmatpush1.bf16.msra.mxu0 0
        %920 = vmatprep.subr.bf16.mxu0 0
        %921 = vmatpush1.bf16.msra.mxu0 0
        %922 = vmatprep.subr.bf16.mxu0 0
        %923 = vmatpush1.bf16.msra.mxu0 0
        %924 = vmatprep.subr.bf16.mxu0 0
        %925 = vmatpush1.bf16.msra.mxu0 0
        %926 = vmatprep.subr.bf16.mxu0 0
        %927 = vmatpush1.bf16.msra.mxu0 0
        %928 = vmatprep.subr.bf16.mxu0 0
        %929 = vmatpush1.bf16.msra.mxu0 0
        %930 = vmatprep.subr.bf16.mxu0 0
        %931 = vmatpush1.bf16.msra.mxu0 0
        %932 = vmatprep.subr.bf16.mxu0 0
        %933 = vmatpush1.bf16.msra.mxu0 0
        %934 = vmatprep.mubr.bf16.mxu0 0
        %935 = vmatmul.mubr.bf16.gmra.mrb[0].mxu0 %v672
        %v936 = vpop.f32.mrb[0].mxu0
        %v937 = vadd.f32 %v293, %v936
        %v938 = vpop.f32.mrb[0].mxu0
        %v939 = vadd.f32 %v293, %v938
        %v940 = vpop.f32.mrb[0].mxu0
        %v941 = vadd.f32 %v298, %v940
        %v942 = vpop.f32.mrb[0].mxu0
        %v943 = vadd.f32 %v298, %v942
        %944 = vmatprep.mubr.bf16.mxu0 0
        %945 = vmatmul.mubr.bf16.gmra.mrb[0].mxu0 %v675
        %v946 = vpop.f32.mrb[0].mxu0
        %v947 = vadd.f32 %v303, %v946
        %v948 = vpop.f32.mrb[0].mxu0
        %v949 = vadd.f32 %v303, %v948
        %v950 = vpop.f32.mrb[0].mxu0
        %v951 = vadd.f32 %v308, %v950
        %v952 = vpop.f32.mrb[0].mxu0
        %v953 = vadd.f32 %v308, %v952
        %954 = vmatprep.mubr.bf16.mxu0 0
        %955 = vmatmul.mubr.bf16.gmra.mrb[0].mxu0 %v678
        %v956 = vpop.f32.mrb[0].mxu0
        %v957 = vadd.f32 %v313, %v956
        %v958 = vpop.f32.mrb[0].mxu0
        %v959 = vadd.f32 %v313, %v958
        %v960 = vpop.f32.mrb[0].mxu0
        %v961 = vadd.f32 %v318, %v960
        %v962 = vpop.f32.mrb[0].mxu0
        %v963 = vadd.f32 %v318, %v962
        %964 = vmatprep.mubr.bf16.mxu0 0
        %965 = vmatmul.mubr.bf16.gmra.mrb[0].mxu0 %v681
        %v966 = vpop.f32.mrb[0].mxu0
        %v967 = vadd.f32 %v323, %v966
        %v968 = vpop.f32.mrb[0].mxu0
        %v969 = vadd.f32 %v323, %v968
        %v970 = vpop.f32.mrb[0].mxu0
        %v971 = vadd.f32 %v328, %v970
        %v972 = vpop.f32.mrb[0].mxu0
        %v973 = vadd.f32 %v328, %v972
        %974 = vdwg.mxu0
        %975 = vmatprep.subr.bf16.mxu0 %v551
        %976 = vmatpush1.bf16.msra.mxu0 %v550
        %977 = vmatprep.subr.bf16.mxu0 %v583
        %978 = vmatpush1.bf16.msra.mxu0 %v582
        %979 = vmatprep.subr.bf16.mxu0 0
        %980 = vmatpush1.bf16.msra.mxu0 0
        %981 = vmatprep.subr.bf16.mxu0 0
        %982 = vmatpush1.bf16.msra.mxu0 0
        %983 = vmatprep.subr.bf16.mxu0 0
        %984 = vmatpush1.bf16.msra.mxu0 0
        %985 = vmatprep.subr.bf16.mxu0 0
        %986 = vmatpush1.bf16.msra.mxu0 0
        %987 = vmatprep.subr.bf16.mxu0 0
        %988 = vmatpush1.bf16.msra.mxu0 0
        %989 = vmatprep.subr.bf16.mxu0 0
        %990 = vmatpush1.bf16.msra.mxu0 0
        %991 = vmatprep.subr.bf16.mxu0 0
        %992 = vmatpush1.bf16.msra.mxu0 0
        %993 = vmatprep.subr.bf16.mxu0 0
        %994 = vmatpush1.bf16.msra.mxu0 0
        %995 = vmatprep.subr.bf16.mxu0 0
        %996 = vmatpush1.bf16.msra.mxu0 0
        %997 = vmatprep.subr.bf16.mxu0 0
        %998 = vmatpush1.bf16.msra.mxu0 0
        %999 = vmatprep.subr.bf16.mxu0 0
        %1000 = vmatpush1.bf16.msra.mxu0 0
        %1001 = vmatprep.subr.bf16.mxu0 0
        %1002 = vmatpush1.bf16.msra.mxu0 0
        %1003 = vmatprep.subr.bf16.mxu0 0
        %1004 = vmatpush1.bf16.msra.mxu0 0
        %1005 = vmatprep.subr.bf16.mxu0 0
        %1006 = vmatpush1.bf16.msra.mxu0 0
        %1007 = vmatprep.mubr.bf16.mxu0 0
        %1008 = vmatmul.mubr.bf16.gmra.mrb[0].mxu0 %v672
        %v1009 = vpop.f32.mrb[0].mxu0
        %v1010 = vadd.f32 %v293, %v1009
        %v1011 = vpop.f32.mrb[0].mxu0
        %v1012 = vadd.f32 %v293, %v1011
        %v1013 = vpop.f32.mrb[0].mxu0
        %v1014 = vadd.f32 %v298, %v1013
        %v1015 = vpop.f32.mrb[0].mxu0
        %v1016 = vadd.f32 %v298, %v1015
        %1017 = vmatprep.mubr.bf16.mxu0 0
        %1018 = vmatmul.mubr.bf16.gmra.mrb[0].mxu0 %v675
        %v1019 = vpop.f32.mrb[0].mxu0
        %v1020 = vadd.f32 %v303, %v1019
        %v1021 = vpop.f32.mrb[0].mxu0
        %v1022 = vadd.f32 %v303, %v1021
        %v1023 = vpop.f32.mrb[0].mxu0
        %v1024 = vadd.f32 %v308, %v1023
        %v1025 = vpop.f32.mrb[0].mxu0
        %v1026 = vadd.f32 %v308, %v1025
        %1027 = vmatprep.mubr.bf16.mxu0 0
        %1028 = vmatmul.mubr.bf16.gmra.mrb[0].mxu0 %v678
        %v1029 = vpop.f32.mrb[0].mxu0
        %v1030 = vadd.f32 %v313, %v1029
        %v1031 = vpop.f32.mrb[0].mxu0
        %v1032 = vadd.f32 %v313, %v1031
        %v1033 = vpop.f32.mrb[0].mxu0
        %v1034 = vadd.f32 %v318, %v1033
        %v1035 = vpop.f32.mrb[0].mxu0
        %v1036 = vadd.f32 %v318, %v1035
        %1037 = vmatprep.mubr.bf16.mxu0 0
        %1038 = vmatmul.mubr.bf16.gmra.mrb[0].mxu0 %v681
        %v1039 = vpop.f32.mrb[0].mxu0
        %v1040 = vadd.f32 %v323, %v1039
        %v1041 = vpop.f32.mrb[0].mxu0
        %v1042 = vadd.f32 %v323, %v1041
        %v1043 = vpop.f32.mrb[0].mxu0
        %v1044 = vadd.f32 %v328, %v1043
        %v1045 = vpop.f32.mrb[0].mxu0
        %v1046 = vadd.f32 %v328, %v1045
        %1047 = vdwg.mxu0
        %1048 = vmatprep.subr.bf16.mxu0 %v553
        %1049 = vmatpush1.bf16.msra.mxu0 %v552
        %1050 = vmatprep.subr.bf16.mxu0 %v585
        %1051 = vmatpush1.bf16.msra.mxu0 %v584
        %1052 = vmatprep.subr.bf16.mxu0 0
        %1053 = vmatpush1.bf16.msra.mxu0 0
        %1054 = vmatprep.subr.bf16.mxu0 0
        %1055 = vmatpush1.bf16.msra.mxu0 0
        %1056 = vmatprep.subr.bf16.mxu0 0
        %1057 = vmatpush1.bf16.msra.mxu0 0
        %1058 = vmatprep.subr.bf16.mxu0 0
        %1059 = vmatpush1.bf16.msra.mxu0 0
        %1060 = vmatprep.subr.bf16.mxu0 0
        %1061 = vmatpush1.bf16.msra.mxu0 0
        %1062 = vmatprep.subr.bf16.mxu0 0
        %1063 = vmatpush1.bf16.msra.mxu0 0
        %1064 = vmatprep.subr.bf16.mxu0 0
        %1065 = vmatpush1.bf16.msra.mxu0 0
        %1066 = vmatprep.subr.bf16.mxu0 0
        %1067 = vmatpush1.bf16.msra.mxu0 0
        %1068 = vmatprep.subr.bf16.mxu0 0
        %1069 = vmatpush1.bf16.msra.mxu0 0
        %1070 = vmatprep.subr.bf16.mxu0 0
        %1071 = vmatpush1.bf16.msra.mxu0 0
        %1072 = vmatprep.subr.bf16.mxu0 0
        %1073 = vmatpush1.bf16.msra.mxu0 0
        %1074 = vmatprep.subr.bf16.mxu0 0
        %1075 = vmatpush1.bf16.msra.mxu0 0
        %1076 = vmatprep.subr.bf16.mxu0 0
        %1077 = vmatpush1.bf16.msra.mxu0 0
        %1078 = vmatprep.subr.bf16.mxu0 0
        %1079 = vmatpush1.bf16.msra.mxu0 0
        %1080 = vmatprep.mubr.bf16.mxu0 0
        %1081 = vmatmul.mubr.bf16.gmra.mrb[0].mxu0 %v672
        %v1082 = vpop.f32.mrb[0].mxu0
        %v1083 = vadd.f32 %v293, %v1082
        %v1084 = vpop.f32.mrb[0].mxu0
        %v1085 = vadd.f32 %v293, %v1084
        %v1086 = vpop.f32.mrb[0].mxu0
        %v1087 = vadd.f32 %v298, %v1086
        %v1088 = vpop.f32.mrb[0].mxu0
        %v1089 = vadd.f32 %v298, %v1088
        %1090 = vmatprep.mubr.bf16.mxu0 0
        %1091 = vmatmul.mubr.bf16.gmra.mrb[0].mxu0 %v675
        %v1092 = vpop.f32.mrb[0].mxu0
        %v1093 = vadd.f32 %v303, %v1092
        %v1094 = vpop.f32.mrb[0].mxu0
        %v1095 = vadd.f32 %v303, %v1094
        %v1096 = vpop.f32.mrb[0].mxu0
        %v1097 = vadd.f32 %v308, %v1096
        %v1098 = vpop.f32.mrb[0].mxu0
        %v1099 = vadd.f32 %v308, %v1098
        %1100 = vmatprep.mubr.bf16.mxu0 0
        %1101 = vmatmul.mubr.bf16.gmra.mrb[0].mxu0 %v678
        %v1102 = vpop.f32.mrb[0].mxu0
        %v1103 = vadd.f32 %v313, %v1102
        %v1104 = vpop.f32.mrb[0].mxu0
        %v1105 = vadd.f32 %v313, %v1104
        %v1106 = vpop.f32.mrb[0].mxu0
        %v1107 = vadd.f32 %v318, %v1106
        %v1108 = vpop.f32.mrb[0].mxu0
        %v1109 = vadd.f32 %v318, %v1108
        %1110 = vmatprep.mubr.bf16.mxu0 0
        %1111 = vmatmul.mubr.bf16.gmra.mrb[0].mxu0 %v681
        %v1112 = vpop.f32.mrb[0].mxu0
        %v1113 = vadd.f32 %v323, %v1112
        %v1114 = vpop.f32.mrb[0].mxu0
        %v1115 = vadd.f32 %v323, %v1114
        %v1116 = vpop.f32.mrb[0].mxu0
        %v1117 = vadd.f32 %v328, %v1116
        %v1118 = vpop.f32.mrb[0].mxu0
        %v1119 = vadd.f32 %v328, %v1118
        %1120 = vdwg.mxu0
        %1121 = vmatprep.subr.bf16.mxu0 %v555
        %1122 = vmatpush1.bf16.msra.mxu0 %v554
        %1123 = vmatprep.subr.bf16.mxu0 %v587
        %1124 = vmatpush1.bf16.msra.mxu0 %v586
        %1125 = vmatprep.subr.bf16.mxu0 0
        %1126 = vmatpush1.bf16.msra.mxu0 0
        %1127 = vmatprep.subr.bf16.mxu0 0
        %1128 = vmatpush1.bf16.msra.mxu0 0
        %1129 = vmatprep.subr.bf16.mxu0 0
        %1130 = vmatpush1.bf16.msra.mxu0 0
        %1131 = vmatprep.subr.bf16.mxu0 0
        %1132 = vmatpush1.bf16.msra.mxu0 0
        %1133 = vmatprep.subr.bf16.mxu0 0
        %1134 = vmatpush1.bf16.msra.mxu0 0
        %1135 = vmatprep.subr.bf16.mxu0 0
        %1136 = vmatpush1.bf16.msra.mxu0 0
        %1137 = vmatprep.subr.bf16.mxu0 0
        %1138 = vmatpush1.bf16.msra.mxu0 0
        %1139 = vmatprep.subr.bf16.mxu0 0
        %1140 = vmatpush1.bf16.msra.mxu0 0
        %1141 = vmatprep.subr.bf16.mxu0 0
        %1142 = vmatpush1.bf16.msra.mxu0 0
        %1143 = vmatprep.subr.bf16.mxu0 0
        %1144 = vmatpush1.bf16.msra.mxu0 0
        %1145 = vmatprep.subr.bf16.mxu0 0
        %1146 = vmatpush1.bf16.msra.mxu0 0
        %1147 = vmatprep.subr.bf16.mxu0 0
        %1148 = vmatpush1.bf16.msra.mxu0 0
        %1149 = vmatprep.subr.bf16.mxu0 0
        %1150 = vmatpush1.bf16.msra.mxu0 0
        %1151 = vmatprep.subr.bf16.mxu0 0
        %1152 = vmatpush1.bf16.msra.mxu0 0
        %1153 = vmatprep.mubr.bf16.mxu0 0
        %1154 = vmatmul.mubr.bf16.gmra.mrb[0].mxu0 %v672
        %v1155 = vpop.f32.mrb[0].mxu0
        %v1156 = vadd.f32 %v293, %v1155
        %v1157 = vpop.f32.mrb[0].mxu0
        %v1158 = vadd.f32 %v293, %v1157
        %v1159 = vpop.f32.mrb[0].mxu0
        %v1160 = vadd.f32 %v298, %v1159
        %v1161 = vpop.f32.mrb[0].mxu0
        %v1162 = vadd.f32 %v298, %v1161
        %1163 = vmatprep.mubr.bf16.mxu0 0
        %1164 = vmatmul.mubr.bf16.gmra.mrb[0].mxu0 %v675
        %v1165 = vpop.f32.mrb[0].mxu0
        %v1166 = vadd.f32 %v303, %v1165
        %v1167 = vpop.f32.mrb[0].mxu0
        %v1168 = vadd.f32 %v303, %v1167
        %v1169 = vpop.f32.mrb[0].mxu0
        %v1170 = vadd.f32 %v308, %v1169
        %v1171 = vpop.f32.mrb[0].mxu0
        %v1172 = vadd.f32 %v308, %v1171
        %1173 = vmatprep.mubr.bf16.mxu0 0
        %1174 = vmatmul.mubr.bf16.gmra.mrb[0].mxu0 %v678
        %v1175 = vpop.f32.mrb[0].mxu0
        %v1176 = vadd.f32 %v313, %v1175
        %v1177 = vpop.f32.mrb[0].mxu0
        %v1178 = vadd.f32 %v313, %v1177
        %v1179 = vpop.f32.mrb[0].mxu0
        %v1180 = vadd.f32 %v318, %v1179
        %v1181 = vpop.f32.mrb[0].mxu0
        %v1182 = vadd.f32 %v318, %v1181
        %1183 = vmatprep.mubr.bf16.mxu0 0
        %1184 = vmatmul.mubr.bf16.gmra.mrb[0].mxu0 %v681
        %v1185 = vpop.f32.mrb[0].mxu0
        %v1186 = vadd.f32 %v323, %v1185
        %v1187 = vpop.f32.mrb[0].mxu0
        %v1188 = vadd.f32 %v323, %v1187
        %v1189 = vpop.f32.mrb[0].mxu0
        %v1190 = vadd.f32 %v328, %v1189
        %v1191 = vpop.f32.mrb[0].mxu0
        %v1192 = vadd.f32 %v328, %v1191
        %1193 = vdwg.mxu0
        %1194 = vmatprep.subr.bf16.mxu0 %v557
        %1195 = vmatpush1.bf16.msra.mxu0 %v556
        %1196 = vmatprep.subr.bf16.mxu0 %v589
        %1197 = vmatpush1.bf16.msra.mxu0 %v588
        %1198 = vmatprep.subr.bf16.mxu0 0
        %1199 = vmatpush1.bf16.msra.mxu0 0
        %1200 = vmatprep.subr.bf16.mxu0 0
        %1201 = vmatpush1.bf16.msra.mxu0 0
        %1202 = vmatprep.subr.bf16.mxu0 0
        %1203 = vmatpush1.bf16.msra.mxu0 0
        %1204 = vmatprep.subr.bf16.mxu0 0
        %1205 = vmatpush1.bf16.msra.mxu0 0
        %1206 = vmatprep.subr.bf16.mxu0 0
        %1207 = vmatpush1.bf16.msra.mxu0 0
        %1208 = vmatprep.subr.bf16.mxu0 0
        %1209 = vmatpush1.bf16.msra.mxu0 0
        %1210 = vmatprep.subr.bf16.mxu0 0
        %1211 = vmatpush1.bf16.msra.mxu0 0
        %1212 = vmatprep.subr.bf16.mxu0 0
        %1213 = vmatpush1.bf16.msra.mxu0 0
        %1214 = vmatprep.subr.bf16.mxu0 0
        %1215 = vmatpush1.bf16.msra.mxu0 0
        %1216 = vmatprep.subr.bf16.mxu0 0
        %1217 = vmatpush1.bf16.msra.mxu0 0
        %1218 = vmatprep.subr.bf16.mxu0 0
        %1219 = vmatpush1.bf16.msra.mxu0 0
        %1220 = vmatprep.subr.bf16.mxu0 0
        %1221 = vmatpush1.bf16.msra.mxu0 0
        %1222 = vmatprep.subr.bf16.mxu0 0
        %1223 = vmatpush1.bf16.msra.mxu0 0
        %1224 = vmatprep.subr.bf16.mxu0 0
        %1225 = vmatpush1.bf16.msra.mxu0 0
        %1226 = vmatprep.mubr.bf16.mxu0 0
        %1227 = vmatmul.mubr.bf16.gmra.mrb[0].mxu0 %v672
        %v1228 = vpop.f32.mrb[0].mxu0
        %v1229 = vadd.f32 %v293, %v1228
        %v1230 = vpop.f32.mrb[0].mxu0
        %v1231 = vadd.f32 %v293, %v1230
        %v1232 = vpop.f32.mrb[0].mxu0
        %v1233 = vadd.f32 %v298, %v1232
        %v1234 = vpop.f32.mrb[0].mxu0
        %v1235 = vadd.f32 %v298, %v1234
        %1236 = vmatprep.mubr.bf16.mxu0 0
        %1237 = vmatmul.mubr.bf16.gmra.mrb[0].mxu0 %v675
        %v1238 = vpop.f32.mrb[0].mxu0
        %v1239 = vadd.f32 %v303, %v1238
        %v1240 = vpop.f32.mrb[0].mxu0
        %v1241 = vadd.f32 %v303, %v1240
        %v1242 = vpop.f32.mrb[0].mxu0
        %v1243 = vadd.f32 %v308, %v1242
        %v1244 = vpop.f32.mrb[0].mxu0
        %v1245 = vadd.f32 %v308, %v1244
        %1246 = vmatprep.mubr.bf16.mxu0 0
        %1247 = vmatmul.mubr.bf16.gmra.mrb[0].mxu0 %v678
        %v1248 = vpop.f32.mrb[0].mxu0
        %v1249 = vadd.f32 %v313, %v1248
        %v1250 = vpop.f32.mrb[0].mxu0
        %v1251 = vadd.f32 %v313, %v1250
        %v1252 = vpop.f32.mrb[0].mxu0
        %v1253 = vadd.f32 %v318, %v1252
        %v1254 = vpop.f32.mrb[0].mxu0
        %v1255 = vadd.f32 %v318, %v1254
        %1256 = vmatprep.mubr.bf16.mxu0 0
        %1257 = vmatmul.mubr.bf16.gmra.mrb[0].mxu0 %v681
        %v1258 = vpop.f32.mrb[0].mxu0
        %v1259 = vadd.f32 %v323, %v1258
        %v1260 = vpop.f32.mrb[0].mxu0
        %v1261 = vadd.f32 %v323, %v1260
        %v1262 = vpop.f32.mrb[0].mxu0
        %v1263 = vadd.f32 %v328, %v1262
        %v1264 = vpop.f32.mrb[0].mxu0
        %v1265 = vadd.f32 %v328, %v1264
        %1266 = vdwg.mxu0
        %1267 = vmatprep.subr.bf16.mxu0 %v559
        %1268 = vmatpush1.bf16.msra.mxu0 %v558
        %1269 = vmatprep.subr.bf16.mxu0 %v591
        %1270 = vmatpush1.bf16.msra.mxu0 %v590
        %1271 = vmatprep.subr.bf16.mxu0 0
        %1272 = vmatpush1.bf16.msra.mxu0 0
        %1273 = vmatprep.subr.bf16.mxu0 0
        %1274 = vmatpush1.bf16.msra.mxu0 0
        %1275 = vmatprep.subr.bf16.mxu0 0
        %1276 = vmatpush1.bf16.msra.mxu0 0
        %1277 = vmatprep.subr.bf16.mxu0 0
        %1278 = vmatpush1.bf16.msra.mxu0 0
        %1279 = vmatprep.subr.bf16.mxu0 0
        %1280 = vmatpush1.bf16.msra.mxu0 0
        %1281 = vmatprep.subr.bf16.mxu0 0
        %1282 = vmatpush1.bf16.msra.mxu0 0
        %1283 = vmatprep.subr.bf16.mxu0 0
        %1284 = vmatpush1.bf16.msra.mxu0 0
        %1285 = vmatprep.subr.bf16.mxu0 0
        %1286 = vmatpush1.bf16.msra.mxu0 0
        %1287 = vmatprep.subr.bf16.mxu0 0
        %1288 = vmatpush1.bf16.msra.mxu0 0
        %1289 = vmatprep.subr.bf16.mxu0 0
        %1290 = vmatpush1.bf16.msra.mxu0 0
        %1291 = vmatprep.subr.bf16.mxu0 0
        %1292 = vmatpush1.bf16.msra.mxu0 0
        %1293 = vmatprep.subr.bf16.mxu0 0
        %1294 = vmatpush1.bf16.msra.mxu0 0
        %1295 = vmatprep.subr.bf16.mxu0 0
        %1296 = vmatpush1.bf16.msra.mxu0 0
        %1297 = vmatprep.subr.bf16.mxu0 0
        %1298 = vmatpush1.bf16.msra.mxu0 0
        %1299 = vmatprep.mubr.bf16.mxu0 0
        %1300 = vmatmul.mubr.bf16.gmra.mrb[0].mxu0 %v672
        %v1301 = vpop.f32.mrb[0].mxu0
        %v1302 = vadd.f32 %v293, %v1301
        %v1303 = vpop.f32.mrb[0].mxu0
        %v1304 = vadd.f32 %v293, %v1303
        %v1305 = vpop.f32.mrb[0].mxu0
        %v1306 = vadd.f32 %v298, %v1305
        %v1307 = vpop.f32.mrb[0].mxu0
        %v1308 = vadd.f32 %v298, %v1307
        %1309 = vmatprep.mubr.bf16.mxu0 0
        %1310 = vmatmul.mubr.bf16.gmra.mrb[0].mxu0 %v675
        %v1311 = vpop.f32.mrb[0].mxu0
        %v1312 = vadd.f32 %v303, %v1311
        %v1313 = vpop.f32.mrb[0].mxu0
        %v1314 = vadd.f32 %v303, %v1313
        %v1315 = vpop.f32.mrb[0].mxu0
        %v1316 = vadd.f32 %v308, %v1315
        %v1317 = vpop.f32.mrb[0].mxu0
        %v1318 = vadd.f32 %v308, %v1317
        %1319 = vmatprep.mubr.bf16.mxu0 0
        %1320 = vmatmul.mubr.bf16.gmra.mrb[0].mxu0 %v678
        %v1321 = vpop.f32.mrb[0].mxu0
        %v1322 = vadd.f32 %v313, %v1321
        %v1323 = vpop.f32.mrb[0].mxu0
        %v1324 = vadd.f32 %v313, %v1323
        %v1325 = vpop.f32.mrb[0].mxu0
        %v1326 = vadd.f32 %v318, %v1325
        %v1327 = vpop.f32.mrb[0].mxu0
        %v1328 = vadd.f32 %v318, %v1327
        %1329 = vmatprep.mubr.bf16.mxu0 0
        %1330 = vmatmul.mubr.bf16.gmra.mrb[0].mxu0 %v681
        %v1331 = vpop.f32.mrb[0].mxu0
        %v1332 = vadd.f32 %v323, %v1331
        %v1333 = vpop.f32.mrb[0].mxu0
        %v1334 = vadd.f32 %v323, %v1333
        %v1335 = vpop.f32.mrb[0].mxu0
        %v1336 = vadd.f32 %v328, %v1335
        %v1337 = vpop.f32.mrb[0].mxu0
        %v1338 = vadd.f32 %v328, %v1337
        %1339 = vdwg.mxu0
        %1340 = vmatprep.subr.bf16.mxu0 %v561
        %1341 = vmatpush1.bf16.msra.mxu0 %v560
        %1342 = vmatprep.subr.bf16.mxu0 %v593
        %1343 = vmatpush1.bf16.msra.mxu0 %v592
        %1344 = vmatprep.subr.bf16.mxu0 0
        %1345 = vmatpush1.bf16.msra.mxu0 0
        %1346 = vmatprep.subr.bf16.mxu0 0
        %1347 = vmatpush1.bf16.msra.mxu0 0
        %1348 = vmatprep.subr.bf16.mxu0 0
        %1349 = vmatpush1.bf16.msra.mxu0 0
        %1350 = vmatprep.subr.bf16.mxu0 0
        %1351 = vmatpush1.bf16.msra.mxu0 0
        %1352 = vmatprep.subr.bf16.mxu0 0
        %1353 = vmatpush1.bf16.msra.mxu0 0
        %1354 = vmatprep.subr.bf16.mxu0 0
        %1355 = vmatpush1.bf16.msra.mxu0 0
        %1356 = vmatprep.subr.bf16.mxu0 0
        %1357 = vmatpush1.bf16.msra.mxu0 0
        %1358 = vmatprep.subr.bf16.mxu0 0
        %1359 = vmatpush1.bf16.msra.mxu0 0
        %1360 = vmatprep.subr.bf16.mxu0 0
        %1361 = vmatpush1.bf16.msra.mxu0 0
        %1362 = vmatprep.subr.bf16.mxu0 0
        %1363 = vmatpush1.bf16.msra.mxu0 0
        %1364 = vmatprep.subr.bf16.mxu0 0
        %1365 = vmatpush1.bf16.msra.mxu0 0
        %1366 = vmatprep.subr.bf16.mxu0 0
        %1367 = vmatpush1.bf16.msra.mxu0 0
        %1368 = vmatprep.subr.bf16.mxu0 0
        %1369 = vmatpush1.bf16.msra.mxu0 0
        %1370 = vmatprep.subr.bf16.mxu0 0
        %1371 = vmatpush1.bf16.msra.mxu0 0
        %1372 = vmatprep.mubr.bf16.mxu0 0
        %1373 = vmatmul.mubr.bf16.gmra.mrb[0].mxu0 %v672
        %v1374 = vpop.f32.mrb[0].mxu0
        %v1375 = vadd.f32 %v293, %v1374
        %v1376 = vpop.f32.mrb[0].mxu0
        %v1377 = vadd.f32 %v293, %v1376
        %v1378 = vpop.f32.mrb[0].mxu0
        %v1379 = vadd.f32 %v298, %v1378
        %v1380 = vpop.f32.mrb[0].mxu0
        %v1381 = vadd.f32 %v298, %v1380
        %1382 = vmatprep.mubr.bf16.mxu0 0
        %1383 = vmatmul.mubr.bf16.gmra.mrb[0].mxu0 %v675
        %v1384 = vpop.f32.mrb[0].mxu0
        %v1385 = vadd.f32 %v303, %v1384
        %v1386 = vpop.f32.mrb[0].mxu0
        %v1387 = vadd.f32 %v303, %v1386
        %v1388 = vpop.f32.mrb[0].mxu0
        %v1389 = vadd.f32 %v308, %v1388
        %v1390 = vpop.f32.mrb[0].mxu0
        %v1391 = vadd.f32 %v308, %v1390
        %1392 = vmatprep.mubr.bf16.mxu0 0
        %1393 = vmatmul.mubr.bf16.gmra.mrb[0].mxu0 %v678
        %v1394 = vpop.f32.mrb[0].mxu0
        %v1395 = vadd.f32 %v313, %v1394
        %v1396 = vpop.f32.mrb[0].mxu0
        %v1397 = vadd.f32 %v313, %v1396
        %v1398 = vpop.f32.mrb[0].mxu0
        %v1399 = vadd.f32 %v318, %v1398
        %v1400 = vpop.f32.mrb[0].mxu0
        %v1401 = vadd.f32 %v318, %v1400
        %1402 = vmatprep.mubr.bf16.mxu0 0
        %1403 = vmatmul.mubr.bf16.gmra.mrb[0].mxu0 %v681
        %v1404 = vpop.f32.mrb[0].mxu0
        %v1405 = vadd.f32 %v323, %v1404
        %v1406 = vpop.f32.mrb[0].mxu0
        %v1407 = vadd.f32 %v323, %v1406
        %v1408 = vpop.f32.mrb[0].mxu0
        %v1409 = vadd.f32 %v328, %v1408
        %v1410 = vpop.f32.mrb[0].mxu0
        %v1411 = vadd.f32 %v328, %v1410
        %1412 = vdwg.mxu0
        %1413 = vmatprep.subr.bf16.mxu0 %v563
        %1414 = vmatpush1.bf16.msra.mxu0 %v562
        %1415 = vmatprep.subr.bf16.mxu0 %v595
        %1416 = vmatpush1.bf16.msra.mxu0 %v594
        %1417 = vmatprep.subr.bf16.mxu0 0
        %1418 = vmatpush1.bf16.msra.mxu0 0
        %1419 = vmatprep.subr.bf16.mxu0 0
        %1420 = vmatpush1.bf16.msra.mxu0 0
        %1421 = vmatprep.subr.bf16.mxu0 0
        %1422 = vmatpush1.bf16.msra.mxu0 0
        %1423 = vmatprep.subr.bf16.mxu0 0
        %1424 = vmatpush1.bf16.msra.mxu0 0
        %1425 = vmatprep.subr.bf16.mxu0 0
        %1426 = vmatpush1.bf16.msra.mxu0 0
        %1427 = vmatprep.subr.bf16.mxu0 0
        %1428 = vmatpush1.bf16.msra.mxu0 0
        %1429 = vmatprep.subr.bf16.mxu0 0
        %1430 = vmatpush1.bf16.msra.mxu0 0
        %1431 = vmatprep.subr.bf16.mxu0 0
        %1432 = vmatpush1.bf16.msra.mxu0 0
        %1433 = vmatprep.subr.bf16.mxu0 0
        %1434 = vmatpush1.bf16.msra.mxu0 0
        %1435 = vmatprep.subr.bf16.mxu0 0
        %1436 = vmatpush1.bf16.msra.mxu0 0
        %1437 = vmatprep.subr.bf16.mxu0 0
        %1438 = vmatpush1.bf16.msra.mxu0 0
        %1439 = vmatprep.subr.bf16.mxu0 0
        %1440 = vmatpush1.bf16.msra.mxu0 0
        %1441 = vmatprep.subr.bf16.mxu0 0
        %1442 = vmatpush1.bf16.msra.mxu0 0
        %1443 = vmatprep.subr.bf16.mxu0 0
        %1444 = vmatpush1.bf16.msra.mxu0 0
        %1445 = vmatprep.mubr.bf16.mxu0 0
        %1446 = vmatmul.mubr.bf16.gmra.mrb[0].mxu0 %v672
        %v1447 = vpop.f32.mrb[0].mxu0
        %v1448 = vadd.f32 %v293, %v1447
        %v1449 = vpop.f32.mrb[0].mxu0
        %v1450 = vadd.f32 %v293, %v1449
        %v1451 = vpop.f32.mrb[0].mxu0
        %v1452 = vadd.f32 %v298, %v1451
        %v1453 = vpop.f32.mrb[0].mxu0
        %v1454 = vadd.f32 %v298, %v1453
        %1455 = vmatprep.mubr.bf16.mxu0 0
        %1456 = vmatmul.mubr.bf16.gmra.mrb[0].mxu0 %v675
        %v1457 = vpop.f32.mrb[0].mxu0
        %v1458 = vadd.f32 %v303, %v1457
        %v1459 = vpop.f32.mrb[0].mxu0
        %v1460 = vadd.f32 %v303, %v1459
        %v1461 = vpop.f32.mrb[0].mxu0
        %v1462 = vadd.f32 %v308, %v1461
        %v1463 = vpop.f32.mrb[0].mxu0
        %v1464 = vadd.f32 %v308, %v1463
        %1465 = vmatprep.mubr.bf16.mxu0 0
        %1466 = vmatmul.mubr.bf16.gmra.mrb[0].mxu0 %v678
        %v1467 = vpop.f32.mrb[0].mxu0
        %v1468 = vadd.f32 %v313, %v1467
        %v1469 = vpop.f32.mrb[0].mxu0
        %v1470 = vadd.f32 %v313, %v1469
        %v1471 = vpop.f32.mrb[0].mxu0
        %v1472 = vadd.f32 %v318, %v1471
        %v1473 = vpop.f32.mrb[0].mxu0
        %v1474 = vadd.f32 %v318, %v1473
        %1475 = vmatprep.mubr.bf16.mxu0 0
        %1476 = vmatmul.mubr.bf16.gmra.mrb[0].mxu0 %v681
        %v1477 = vpop.f32.mrb[0].mxu0
        %v1478 = vadd.f32 %v323, %v1477
        %v1479 = vpop.f32.mrb[0].mxu0
        %v1480 = vadd.f32 %v323, %v1479
        %v1481 = vpop.f32.mrb[0].mxu0
        %v1482 = vadd.f32 %v328, %v1481
        %v1483 = vpop.f32.mrb[0].mxu0
        %v1484 = vadd.f32 %v328, %v1483
        %1485 = vdwg.mxu0
        %1486 = vmatprep.subr.bf16.mxu0 %v565
        %1487 = vmatpush1.bf16.msra.mxu0 %v564
        %1488 = vmatprep.subr.bf16.mxu0 %v597
        %1489 = vmatpush1.bf16.msra.mxu0 %v596
        %1490 = vmatprep.subr.bf16.mxu0 0
        %1491 = vmatpush1.bf16.msra.mxu0 0
        %1492 = vmatprep.subr.bf16.mxu0 0
        %1493 = vmatpush1.bf16.msra.mxu0 0
        %1494 = vmatprep.subr.bf16.mxu0 0
        %1495 = vmatpush1.bf16.msra.mxu0 0
        %1496 = vmatprep.subr.bf16.mxu0 0
        %1497 = vmatpush1.bf16.msra.mxu0 0
        %1498 = vmatprep.subr.bf16.mxu0 0
        %1499 = vmatpush1.bf16.msra.mxu0 0
        %1500 = vmatprep.subr.bf16.mxu0 0
        %1501 = vmatpush1.bf16.msra.mxu0 0
        %1502 = vmatprep.subr.bf16.mxu0 0
        %1503 = vmatpush1.bf16.msra.mxu0 0
        %1504 = vmatprep.subr.bf16.mxu0 0
        %1505 = vmatpush1.bf16.msra.mxu0 0
        %1506 = vmatprep.subr.bf16.mxu0 0
        %1507 = vmatpush1.bf16.msra.mxu0 0
        %1508 = vmatprep.subr.bf16.mxu0 0
        %1509 = vmatpush1.bf16.msra.mxu0 0
        %1510 = vmatprep.subr.bf16.mxu0 0
        %1511 = vmatpush1.bf16.msra.mxu0 0
        %1512 = vmatprep.subr.bf16.mxu0 0
        %1513 = vmatpush1.bf16.msra.mxu0 0
        %1514 = vmatprep.subr.bf16.mxu0 0
        %1515 = vmatpush1.bf16.msra.mxu0 0
        %1516 = vmatprep.subr.bf16.mxu0 0
        %1517 = vmatpush1.bf16.msra.mxu0 0
        %1518 = vmatprep.mubr.bf16.mxu0 0
        %1519 = vmatmul.mubr.bf16.gmra.mrb[0].mxu0 %v672
        %v1520 = vpop.f32.mrb[0].mxu0
        %v1521 = vadd.f32 %v293, %v1520
        %v1522 = vpop.f32.mrb[0].mxu0
        %v1523 = vadd.f32 %v293, %v1522
        %v1524 = vpop.f32.mrb[0].mxu0
        %v1525 = vadd.f32 %v298, %v1524
        %v1526 = vpop.f32.mrb[0].mxu0
        %v1527 = vadd.f32 %v298, %v1526
        %1528 = vmatprep.mubr.bf16.mxu0 0
        %1529 = vmatmul.mubr.bf16.gmra.mrb[0].mxu0 %v675
        %v1530 = vpop.f32.mrb[0].mxu0
        %v1531 = vadd.f32 %v303, %v1530
        %v1532 = vpop.f32.mrb[0].mxu0
        %v1533 = vadd.f32 %v303, %v1532
        %v1534 = vpop.f32.mrb[0].mxu0
        %v1535 = vadd.f32 %v308, %v1534
        %v1536 = vpop.f32.mrb[0].mxu0
        %v1537 = vadd.f32 %v308, %v1536
        %1538 = vmatprep.mubr.bf16.mxu0 0
        %1539 = vmatmul.mubr.bf16.gmra.mrb[0].mxu0 %v678
        %v1540 = vpop.f32.mrb[0].mxu0
        %v1541 = vadd.f32 %v313, %v1540
        %v1542 = vpop.f32.mrb[0].mxu0
        %v1543 = vadd.f32 %v313, %v1542
        %v1544 = vpop.f32.mrb[0].mxu0
        %v1545 = vadd.f32 %v318, %v1544
        %v1546 = vpop.f32.mrb[0].mxu0
        %v1547 = vadd.f32 %v318, %v1546
        %1548 = vmatprep.mubr.bf16.mxu0 0
        %1549 = vmatmul.mubr.bf16.gmra.mrb[0].mxu0 %v681
        %v1550 = vpop.f32.mrb[0].mxu0
        %v1551 = vadd.f32 %v323, %v1550
        %v1552 = vpop.f32.mrb[0].mxu0
        %v1553 = vadd.f32 %v323, %v1552
        %v1554 = vpop.f32.mrb[0].mxu0
        %v1555 = vadd.f32 %v328, %v1554
        %v1556 = vpop.f32.mrb[0].mxu0
        %v1557 = vadd.f32 %v328, %v1556
        %1558 = vdwg.mxu0
        %1559 = vmatprep.subr.bf16.mxu0 %v567
        %1560 = vmatpush1.bf16.msra.mxu0 %v566
        %1561 = vmatprep.subr.bf16.mxu0 %v599
        %1562 = vmatpush1.bf16.msra.mxu0 %v598
        %1563 = vmatprep.subr.bf16.mxu0 0
        %1564 = vmatpush1.bf16.msra.mxu0 0
        %1565 = vmatprep.subr.bf16.mxu0 0
        %1566 = vmatpush1.bf16.msra.mxu0 0
        %1567 = vmatprep.subr.bf16.mxu0 0
        %1568 = vmatpush1.bf16.msra.mxu0 0
        %1569 = vmatprep.subr.bf16.mxu0 0
        %1570 = vmatpush1.bf16.msra.mxu0 0
        %1571 = vmatprep.subr.bf16.mxu0 0
        %1572 = vmatpush1.bf16.msra.mxu0 0
        %1573 = vmatprep.subr.bf16.mxu0 0
        %1574 = vmatpush1.bf16.msra.mxu0 0
        %1575 = vmatprep.subr.bf16.mxu0 0
        %1576 = vmatpush1.bf16.msra.mxu0 0
        %1577 = vmatprep.subr.bf16.mxu0 0
        %1578 = vmatpush1.bf16.msra.mxu0 0
        %1579 = vmatprep.subr.bf16.mxu0 0
        %1580 = vmatpush1.bf16.msra.mxu0 0
        %1581 = vmatprep.subr.bf16.mxu0 0
        %1582 = vmatpush1.bf16.msra.mxu0 0
        %1583 = vmatprep.subr.bf16.mxu0 0
        %1584 = vmatpush1.bf16.msra.mxu0 0
        %1585 = vmatprep.subr.bf16.mxu0 0
        %1586 = vmatpush1.bf16.msra.mxu0 0
        %1587 = vmatprep.subr.bf16.mxu0 0
        %1588 = vmatpush1.bf16.msra.mxu0 0
        %1589 = vmatprep.subr.bf16.mxu0 0
        %1590 = vmatpush1.bf16.msra.mxu0 0
        %1591 = vmatprep.mubr.bf16.mxu0 0
        %1592 = vmatmul.mubr.bf16.gmra.mrb[0].mxu0 %v672
        %v1593 = vpop.f32.mrb[0].mxu0
        %v1594 = vadd.f32 %v293, %v1593
        %v1595 = vpop.f32.mrb[0].mxu0
        %v1596 = vadd.f32 %v293, %v1595
        %v1597 = vpop.f32.mrb[0].mxu0
        %v1598 = vadd.f32 %v298, %v1597
        %v1599 = vpop.f32.mrb[0].mxu0
        %v1600 = vadd.f32 %v298, %v1599
        %1601 = vmatprep.mubr.bf16.mxu0 0
        %1602 = vmatmul.mubr.bf16.gmra.mrb[0].mxu0 %v675
        %v1603 = vpop.f32.mrb[0].mxu0
        %v1604 = vadd.f32 %v303, %v1603
        %v1605 = vpop.f32.mrb[0].mxu0
        %v1606 = vadd.f32 %v303, %v1605
        %v1607 = vpop.f32.mrb[0].mxu0
        %v1608 = vadd.f32 %v308, %v1607
        %v1609 = vpop.f32.mrb[0].mxu0
        %v1610 = vadd.f32 %v308, %v1609
        %1611 = vmatprep.mubr.bf16.mxu0 0
        %1612 = vmatmul.mubr.bf16.gmra.mrb[0].mxu0 %v678
        %v1613 = vpop.f32.mrb[0].mxu0
        %v1614 = vadd.f32 %v313, %v1613
        %v1615 = vpop.f32.mrb[0].mxu0
        %v1616 = vadd.f32 %v313, %v1615
        %v1617 = vpop.f32.mrb[0].mxu0
        %v1618 = vadd.f32 %v318, %v1617
        %v1619 = vpop.f32.mrb[0].mxu0
        %v1620 = vadd.f32 %v318, %v1619
        %1621 = vmatprep.mubr.bf16.mxu0 0
        %1622 = vmatmul.mubr.bf16.gmra.mrb[0].mxu0 %v681
        %v1623 = vpop.f32.mrb[0].mxu0
        %v1624 = vadd.f32 %v323, %v1623
        %v1625 = vpop.f32.mrb[0].mxu0
        %v1626 = vadd.f32 %v323, %v1625
        %v1627 = vpop.f32.mrb[0].mxu0
        %v1628 = vadd.f32 %v328, %v1627
        %v1629 = vpop.f32.mrb[0].mxu0
        %v1630 = vadd.f32 %v328, %v1629
        %1631 = vdwg.mxu0
        %1632 = vmatprep.subr.bf16.mxu0 %v569
        %1633 = vmatpush1.bf16.msra.mxu0 %v568
        %1634 = vmatprep.subr.bf16.mxu0 %v601
        %1635 = vmatpush1.bf16.msra.mxu0 %v600
        %1636 = vmatprep.subr.bf16.mxu0 0
        %1637 = vmatpush1.bf16.msra.mxu0 0
        %1638 = vmatprep.subr.bf16.mxu0 0
        %1639 = vmatpush1.bf16.msra.mxu0 0
        %1640 = vmatprep.subr.bf16.mxu0 0
        %1641 = vmatpush1.bf16.msra.mxu0 0
        %1642 = vmatprep.subr.bf16.mxu0 0
        %1643 = vmatpush1.bf16.msra.mxu0 0
        %1644 = vmatprep.subr.bf16.mxu0 0
        %1645 = vmatpush1.bf16.msra.mxu0 0
        %1646 = vmatprep.subr.bf16.mxu0 0
        %1647 = vmatpush1.bf16.msra.mxu0 0
        %1648 = vmatprep.subr.bf16.mxu0 0
        %1649 = vmatpush1.bf16.msra.mxu0 0
        %1650 = vmatprep.subr.bf16.mxu0 0
        %1651 = vmatpush1.bf16.msra.mxu0 0
        %1652 = vmatprep.subr.bf16.mxu0 0
        %1653 = vmatpush1.bf16.msra.mxu0 0
        %1654 = vmatprep.subr.bf16.mxu0 0
        %1655 = vmatpush1.bf16.msra.mxu0 0
        %1656 = vmatprep.subr.bf16.mxu0 0
        %1657 = vmatpush1.bf16.msra.mxu0 0
        %1658 = vmatprep.subr.bf16.mxu0 0
        %1659 = vmatpush1.bf16.msra.mxu0 0
        %1660 = vmatprep.subr.bf16.mxu0 0
        %1661 = vmatpush1.bf16.msra.mxu0 0
        %1662 = vmatprep.subr.bf16.mxu0 0
        %1663 = vmatpush1.bf16.msra.mxu0 0
        %1664 = vmatprep.mubr.bf16.mxu0 0
        %1665 = vmatmul.mubr.bf16.gmra.mrb[0].mxu0 %v672
        %v1666 = vpop.f32.mrb[0].mxu0
        %v1667 = vadd.f32 %v293, %v1666
        %v1668 = vpop.f32.mrb[0].mxu0
        %v1669 = vadd.f32 %v293, %v1668
        %v1670 = vpop.f32.mrb[0].mxu0
        %v1671 = vadd.f32 %v298, %v1670
        %v1672 = vpop.f32.mrb[0].mxu0
        %v1673 = vadd.f32 %v298, %v1672
        %1674 = vmatprep.mubr.bf16.mxu0 0
        %1675 = vmatmul.mubr.bf16.gmra.mrb[0].mxu0 %v675
        %v1676 = vpop.f32.mrb[0].mxu0
        %v1677 = vadd.f32 %v303, %v1676
        %v1678 = vpop.f32.mrb[0].mxu0
        %v1679 = vadd.f32 %v303, %v1678
        %v1680 = vpop.f32.mrb[0].mxu0
        %v1681 = vadd.f32 %v308, %v1680
        %v1682 = vpop.f32.mrb[0].mxu0
        %v1683 = vadd.f32 %v308, %v1682
        %1684 = vmatprep.mubr.bf16.mxu0 0
        %1685 = vmatmul.mubr.bf16.gmra.mrb[0].mxu0 %v678
        %v1686 = vpop.f32.mrb[0].mxu0
        %v1687 = vadd.f32 %v313, %v1686
        %v1688 = vpop.f32.mrb[0].mxu0
        %v1689 = vadd.f32 %v313, %v1688
        %v1690 = vpop.f32.mrb[0].mxu0
        %v1691 = vadd.f32 %v318, %v1690
        %v1692 = vpop.f32.mrb[0].mxu0
        %v1693 = vadd.f32 %v318, %v1692
        %1694 = vmatprep.mubr.bf16.mxu0 0
        %1695 = vmatmul.mubr.bf16.gmra.mrb[0].mxu0 %v681
        %v1696 = vpop.f32.mrb[0].mxu0
        %v1697 = vadd.f32 %v323, %v1696
        %v1698 = vpop.f32.mrb[0].mxu0
        %v1699 = vadd.f32 %v323, %v1698
        %v1700 = vpop.f32.mrb[0].mxu0
        %v1701 = vadd.f32 %v328, %v1700
        %v1702 = vpop.f32.mrb[0].mxu0
        %v1703 = vadd.f32 %v328, %v1702
        %1704 = vdwg.mxu0
        %1705 = vmatprep.subr.bf16.mxu0 %v571
        %1706 = vmatpush1.bf16.msra.mxu0 %v570
        %1707 = vmatprep.subr.bf16.mxu0 %v603
        %1708 = vmatpush1.bf16.msra.mxu0 %v602
        %1709 = vmatprep.subr.bf16.mxu0 0
        %1710 = vmatpush1.bf16.msra.mxu0 0
        %1711 = vmatprep.subr.bf16.mxu0 0
        %1712 = vmatpush1.bf16.msra.mxu0 0
        %1713 = vmatprep.subr.bf16.mxu0 0
        %1714 = vmatpush1.bf16.msra.mxu0 0
        %1715 = vmatprep.subr.bf16.mxu0 0
        %1716 = vmatpush1.bf16.msra.mxu0 0
        %1717 = vmatprep.subr.bf16.mxu0 0
        %1718 = vmatpush1.bf16.msra.mxu0 0
        %1719 = vmatprep.subr.bf16.mxu0 0
        %1720 = vmatpush1.bf16.msra.mxu0 0
        %1721 = vmatprep.subr.bf16.mxu0 0
        %1722 = vmatpush1.bf16.msra.mxu0 0
        %1723 = vmatprep.subr.bf16.mxu0 0
        %1724 = vmatpush1.bf16.msra.mxu0 0
        %1725 = vmatprep.subr.bf16.mxu0 0
        %1726 = vmatpush1.bf16.msra.mxu0 0
        %1727 = vmatprep.subr.bf16.mxu0 0
        %1728 = vmatpush1.bf16.msra.mxu0 0
        %1729 = vmatprep.subr.bf16.mxu0 0
        %1730 = vmatpush1.bf16.msra.mxu0 0
        %1731 = vmatprep.subr.bf16.mxu0 0
        %1732 = vmatpush1.bf16.msra.mxu0 0
        %1733 = vmatprep.subr.bf16.mxu0 0
        %1734 = vmatpush1.bf16.msra.mxu0 0
        %1735 = vmatprep.subr.bf16.mxu0 0
        %1736 = vmatpush1.bf16.msra.mxu0 0
        %1737 = vmatprep.mubr.bf16.mxu0 0
        %1738 = vmatmul.mubr.bf16.gmra.mrb[0].mxu0 %v672
        %v1739 = vpop.f32.mrb[0].mxu0
        %v1740 = vadd.f32 %v293, %v1739
        %v1741 = vpop.f32.mrb[0].mxu0
        %v1742 = vadd.f32 %v293, %v1741
        %v1743 = vpop.f32.mrb[0].mxu0
        %v1744 = vadd.f32 %v298, %v1743
        %v1745 = vpop.f32.mrb[0].mxu0
        %v1746 = vadd.f32 %v298, %v1745
        %1747 = vmatprep.mubr.bf16.mxu0 0
        %1748 = vmatmul.mubr.bf16.gmra.mrb[0].mxu0 %v675
        %v1749 = vpop.f32.mrb[0].mxu0
        %v1750 = vadd.f32 %v303, %v1749
        %v1751 = vpop.f32.mrb[0].mxu0
        %v1752 = vadd.f32 %v303, %v1751
        %v1753 = vpop.f32.mrb[0].mxu0
        %v1754 = vadd.f32 %v308, %v1753
        %v1755 = vpop.f32.mrb[0].mxu0
        %v1756 = vadd.f32 %v308, %v1755
        %1757 = vmatprep.mubr.bf16.mxu0 0
        %1758 = vmatmul.mubr.bf16.gmra.mrb[0].mxu0 %v678
        %v1759 = vpop.f32.mrb[0].mxu0
        %v1760 = vadd.f32 %v313, %v1759
        %v1761 = vpop.f32.mrb[0].mxu0
        %v1762 = vadd.f32 %v313, %v1761
        %v1763 = vpop.f32.mrb[0].mxu0
        %v1764 = vadd.f32 %v318, %v1763
        %v1765 = vpop.f32.mrb[0].mxu0
        %v1766 = vadd.f32 %v318, %v1765
        %1767 = vmatprep.mubr.bf16.mxu0 0
        %1768 = vmatmul.mubr.bf16.gmra.mrb[0].mxu0 %v681
        %v1769 = vpop.f32.mrb[0].mxu0
        %v1770 = vadd.f32 %v323, %v1769
        %v1771 = vpop.f32.mrb[0].mxu0
        %v1772 = vadd.f32 %v323, %v1771
        %v1773 = vpop.f32.mrb[0].mxu0
        %v1774 = vadd.f32 %v328, %v1773
        %v1775 = vpop.f32.mrb[0].mxu0
        %v1776 = vadd.f32 %v328, %v1775
        %1777 = vdwg.mxu0
        %1778 = vmatprep.subr.bf16.mxu0 %v573
        %1779 = vmatpush1.bf16.msra.mxu0 %v572
        %1780 = vmatprep.subr.bf16.mxu0 %v605
        %1781 = vmatpush1.bf16.msra.mxu0 %v604
        %1782 = vmatprep.subr.bf16.mxu0 0
        %1783 = vmatpush1.bf16.msra.mxu0 0
        %1784 = vmatprep.subr.bf16.mxu0 0
        %1785 = vmatpush1.bf16.msra.mxu0 0
        %1786 = vmatprep.subr.bf16.mxu0 0
        %1787 = vmatpush1.bf16.msra.mxu0 0
        %1788 = vmatprep.subr.bf16.mxu0 0
        %1789 = vmatpush1.bf16.msra.mxu0 0
        %1790 = vmatprep.subr.bf16.mxu0 0
        %1791 = vmatpush1.bf16.msra.mxu0 0
        %1792 = vmatprep.subr.bf16.mxu0 0
        %1793 = vmatpush1.bf16.msra.mxu0 0
        %1794 = vmatprep.subr.bf16.mxu0 0
        %1795 = vmatpush1.bf16.msra.mxu0 0
        %1796 = vmatprep.subr.bf16.mxu0 0
        %1797 = vmatpush1.bf16.msra.mxu0 0
        %1798 = vmatprep.subr.bf16.mxu0 0
        %1799 = vmatpush1.bf16.msra.mxu0 0
        %1800 = vmatprep.subr.bf16.mxu0 0
        %1801 = vmatpush1.bf16.msra.mxu0 0
        %1802 = vmatprep.subr.bf16.mxu0 0
        %1803 = vmatpush1.bf16.msra.mxu0 0
        %1804 = vmatprep.subr.bf16.mxu0 0
        %1805 = vmatpush1.bf16.msra.mxu0 0
        %1806 = vmatprep.subr.bf16.mxu0 0
        %1807 = vmatpush1.bf16.msra.mxu0 0
        %1808 = vmatprep.subr.bf16.mxu0 0
        %1809 = vmatpush1.bf16.msra.mxu0 0
        %1810 = vmatprep.mubr.bf16.mxu0 0
        %1811 = vmatmul.mubr.bf16.gmra.mrb[0].mxu0 %v672
        %v1812 = vpop.f32.mrb[0].mxu0
        %v1813 = vadd.f32 %v293, %v1812
        %v1814 = vpop.f32.mrb[0].mxu0
        %v1815 = vadd.f32 %v293, %v1814
        %v1816 = vpop.f32.mrb[0].mxu0
        %v1817 = vadd.f32 %v298, %v1816
        %v1818 = vpop.f32.mrb[0].mxu0
        %v1819 = vadd.f32 %v298, %v1818
        %1820 = vmatprep.mubr.bf16.mxu0 0
        %1821 = vmatmul.mubr.bf16.gmra.mrb[0].mxu0 %v675
        %v1822 = vpop.f32.mrb[0].mxu0
        %v1823 = vadd.f32 %v303, %v1822
        %v1824 = vpop.f32.mrb[0].mxu0
        %v1825 = vadd.f32 %v303, %v1824
        %v1826 = vpop.f32.mrb[0].mxu0
        %v1827 = vadd.f32 %v308, %v1826
        %v1828 = vpop.f32.mrb[0].mxu0
        %v1829 = vadd.f32 %v308, %v1828
        %1830 = vmatprep.mubr.bf16.mxu0 0
        %1831 = vmatmul.mubr.bf16.gmra.mrb[0].mxu0 %v678
        %v1832 = vpop.f32.mrb[0].mxu0
        %v1833 = vadd.f32 %v313, %v1832
        %v1834 = vpop.f32.mrb[0].mxu0
        %v1835 = vadd.f32 %v313, %v1834
        %v1836 = vpop.f32.mrb[0].mxu0
        %v1837 = vadd.f32 %v318, %v1836
        %v1838 = vpop.f32.mrb[0].mxu0
        %v1839 = vadd.f32 %v318, %v1838
        %1840 = vmatprep.mubr.bf16.mxu0 0
        %1841 = vmatmul.mubr.bf16.gmra.mrb[0].mxu0 %v681
        %v1842 = vpop.f32.mrb[0].mxu0
        %v1843 = vadd.f32 %v323, %v1842
        %v1844 = vpop.f32.mrb[0].mxu0
        %v1845 = vadd.f32 %v323, %v1844
        %v1846 = vpop.f32.mrb[0].mxu0
        %v1847 = vadd.f32 %v328, %v1846
        %v1848 = vpop.f32.mrb[0].mxu0
        %v1849 = vadd.f32 %v328, %v1848
        %1850 = vdwg.mxu0
        %v1851 = vmax.f32 %v718, 0.0
        %v1852 = vmax.f32 %v720, 0.0
        %v1853 = vmax.f32 %v791, 0.0
        %v1854 = vmax.f32 %v793, 0.0
        %v1855 = vmax.f32 %v864, 0.0
        %v1856 = vmax.f32 %v866, 0.0
        %v1857 = vmax.f32 %v937, 0.0
        %v1858 = vmax.f32 %v939, 0.0
        %v1859 = vmax.f32 %v1010, 0.0
        %v1860 = vmax.f32 %v1012, 0.0
        %v1861 = vmax.f32 %v1083, 0.0
        %v1862 = vmax.f32 %v1085, 0.0
        %v1863 = vmax.f32 %v1156, 0.0
        %v1864 = vmax.f32 %v1158, 0.0
        %v1865 = vmax.f32 %v1229, 0.0
        %v1866 = vmax.f32 %v1231, 0.0
        %v1867 = vmax.f32 %v1302, 0.0
        %v1868 = vmax.f32 %v1304, 0.0
        %v1869 = vmax.f32 %v1375, 0.0
        %v1870 = vmax.f32 %v1377, 0.0
        %v1871 = vmax.f32 %v1448, 0.0
        %v1872 = vmax.f32 %v1450, 0.0
        %v1873 = vmax.f32 %v1521, 0.0
        %v1874 = vmax.f32 %v1523, 0.0
        %v1875 = vmax.f32 %v1594, 0.0
        %v1876 = vmax.f32 %v1596, 0.0
        %v1877 = vmax.f32 %v1667, 0.0
        %v1878 = vmax.f32 %v1669, 0.0
        %v1879 = vmax.f32 %v1740, 0.0
        %v1880 = vmax.f32 %v1742, 0.0
        %v1881 = vmax.f32 %v1813, 0.0
        %v1882 = vmax.f32 %v1815, 0.0
        %v1883 = vmax.f32 %v722, 0.0
        %v1884 = vmax.f32 %v724, 0.0
        %v1885 = vmax.f32 %v795, 0.0
        %v1886 = vmax.f32 %v797, 0.0
        %v1887 = vmax.f32 %v868, 0.0
        %v1888 = vmax.f32 %v870, 0.0
        %v1889 = vmax.f32 %v941, 0.0
        %v1890 = vmax.f32 %v943, 0.0
        %v1891 = vmax.f32 %v1014, 0.0
        %v1892 = vmax.f32 %v1016, 0.0
        %v1893 = vmax.f32 %v1087, 0.0
        %v1894 = vmax.f32 %v1089, 0.0
        %v1895 = vmax.f32 %v1160, 0.0
        %v1896 = vmax.f32 %v1162, 0.0
        %v1897 = vmax.f32 %v1233, 0.0
        %v1898 = vmax.f32 %v1235, 0.0
        %v1899 = vmax.f32 %v1306, 0.0
        %v1900 = vmax.f32 %v1308, 0.0
        %v1901 = vmax.f32 %v1379, 0.0
        %v1902 = vmax.f32 %v1381, 0.0
        %v1903 = vmax.f32 %v1452, 0.0
        %v1904 = vmax.f32 %v1454, 0.0
        %v1905 = vmax.f32 %v1525, 0.0
        %v1906 = vmax.f32 %v1527, 0.0
        %v1907 = vmax.f32 %v1598, 0.0
        %v1908 = vmax.f32 %v1600, 0.0
        %v1909 = vmax.f32 %v1671, 0.0
        %v1910 = vmax.f32 %v1673, 0.0
        %v1911 = vmax.f32 %v1744, 0.0
        %v1912 = vmax.f32 %v1746, 0.0
        %v1913 = vmax.f32 %v1817, 0.0
        %v1914 = vmax.f32 %v1819, 0.0
        %v1915 = vmax.f32 %v728, 0.0
        %v1916 = vmax.f32 %v730, 0.0
        %v1917 = vmax.f32 %v801, 0.0
        %v1918 = vmax.f32 %v803, 0.0
        %v1919 = vmax.f32 %v874, 0.0
        %v1920 = vmax.f32 %v876, 0.0
        %v1921 = vmax.f32 %v947, 0.0
        %v1922 = vmax.f32 %v949, 0.0
        %v1923 = vmax.f32 %v1020, 0.0
        %v1924 = vmax.f32 %v1022, 0.0
        %v1925 = vmax.f32 %v1093, 0.0
        %v1926 = vmax.f32 %v1095, 0.0
        %v1927 = vmax.f32 %v1166, 0.0
        %v1928 = vmax.f32 %v1168, 0.0
        %v1929 = vmax.f32 %v1239, 0.0
        %v1930 = vmax.f32 %v1241, 0.0
        %v1931 = vmax.f32 %v1312, 0.0
        %v1932 = vmax.f32 %v1314, 0.0
        %v1933 = vmax.f32 %v1385, 0.0
        %v1934 = vmax.f32 %v1387, 0.0
        %v1935 = vmax.f32 %v1458, 0.0
        %v1936 = vmax.f32 %v1460, 0.0
        %v1937 = vmax.f32 %v1531, 0.0
        %v1938 = vmax.f32 %v1533, 0.0
        %v1939 = vmax.f32 %v1604, 0.0
        %v1940 = vmax.f32 %v1606, 0.0
        %v1941 = vmax.f32 %v1677, 0.0
        %v1942 = vmax.f32 %v1679, 0.0
        %v1943 = vmax.f32 %v1750, 0.0
        %v1944 = vmax.f32 %v1752, 0.0
        %v1945 = vmax.f32 %v1823, 0.0
        %v1946 = vmax.f32 %v1825, 0.0
        %v1947 = vmax.f32 %v732, 0.0
        %v1948 = vmax.f32 %v734, 0.0
        %v1949 = vmax.f32 %v805, 0.0
        %v1950 = vmax.f32 %v807, 0.0
        %v1951 = vmax.f32 %v878, 0.0
        %v1952 = vmax.f32 %v880, 0.0
        %v1953 = vmax.f32 %v951, 0.0
        %v1954 = vmax.f32 %v953, 0.0
        %v1955 = vmax.f32 %v1024, 0.0
        %v1956 = vmax.f32 %v1026, 0.0
        %v1957 = vmax.f32 %v1097, 0.0
        %v1958 = vmax.f32 %v1099, 0.0
        %v1959 = vmax.f32 %v1170, 0.0
        %v1960 = vmax.f32 %v1172, 0.0
        %v1961 = vmax.f32 %v1243, 0.0
        %v1962 = vmax.f32 %v1245, 0.0
        %v1963 = vmax.f32 %v1316, 0.0
        %v1964 = vmax.f32 %v1318, 0.0
        %v1965 = vmax.f32 %v1389, 0.0
        %v1966 = vmax.f32 %v1391, 0.0
        %v1967 = vmax.f32 %v1462, 0.0
        %v1968 = vmax.f32 %v1464, 0.0
        %v1969 = vmax.f32 %v1535, 0.0
        %v1970 = vmax.f32 %v1537, 0.0
        %v1971 = vmax.f32 %v1608, 0.0
        %v1972 = vmax.f32 %v1610, 0.0
        %v1973 = vmax.f32 %v1681, 0.0
        %v1974 = vmax.f32 %v1683, 0.0
        %v1975 = vmax.f32 %v1754, 0.0
        %v1976 = vmax.f32 %v1756, 0.0
        %v1977 = vmax.f32 %v1827, 0.0
        %v1978 = vmax.f32 %v1829, 0.0
        %v1979 = vmax.f32 %v738, 0.0
        %v1980 = vmax.f32 %v740, 0.0
        %v1981 = vmax.f32 %v811, 0.0
        %v1982 = vmax.f32 %v813, 0.0
        %v1983 = vmax.f32 %v884, 0.0
        %v1984 = vmax.f32 %v886, 0.0
        %v1985 = vmax.f32 %v957, 0.0
        %v1986 = vmax.f32 %v959, 0.0
        %v1987 = vmax.f32 %v1030, 0.0
        %v1988 = vmax.f32 %v1032, 0.0
        %v1989 = vmax.f32 %v1103, 0.0
        %v1990 = vmax.f32 %v1105, 0.0
        %v1991 = vmax.f32 %v1176, 0.0
        %v1992 = vmax.f32 %v1178, 0.0
        %v1993 = vmax.f32 %v1249, 0.0
        %v1994 = vmax.f32 %v1251, 0.0
        %v1995 = vmax.f32 %v1322, 0.0
        %v1996 = vmax.f32 %v1324, 0.0
        %v1997 = vmax.f32 %v1395, 0.0
        %v1998 = vmax.f32 %v1397, 0.0
        %v1999 = vmax.f32 %v1468, 0.0
        %v2000 = vmax.f32 %v1470, 0.0
        %v2001 = vmax.f32 %v1541, 0.0
        %v2002 = vmax.f32 %v1543, 0.0
        %v2003 = vmax.f32 %v1614, 0.0
        %v2004 = vmax.f32 %v1616, 0.0
        %v2005 = vmax.f32 %v1687, 0.0
        %v2006 = vmax.f32 %v1689, 0.0
        %v2007 = vmax.f32 %v1760, 0.0
        %v2008 = vmax.f32 %v1762, 0.0
        %v2009 = vmax.f32 %v1833, 0.0
        %v2010 = vmax.f32 %v1835, 0.0
        %v2011 = vmax.f32 %v742, 0.0
        %v2012 = vmax.f32 %v744, 0.0
        %v2013 = vmax.f32 %v815, 0.0
        %v2014 = vmax.f32 %v817, 0.0
        %v2015 = vmax.f32 %v888, 0.0
        %v2016 = vmax.f32 %v890, 0.0
        %v2017 = vmax.f32 %v961, 0.0
        %v2018 = vmax.f32 %v963, 0.0
        %v2019 = vmax.f32 %v1034, 0.0
        %v2020 = vmax.f32 %v1036, 0.0
        %v2021 = vmax.f32 %v1107, 0.0
        %v2022 = vmax.f32 %v1109, 0.0
        %v2023 = vmax.f32 %v1180, 0.0
        %v2024 = vmax.f32 %v1182, 0.0
        %v2025 = vmax.f32 %v1253, 0.0
        %v2026 = vmax.f32 %v1255, 0.0
        %v2027 = vmax.f32 %v1326, 0.0
        %v2028 = vmax.f32 %v1328, 0.0
        %v2029 = vmax.f32 %v1399, 0.0
        %v2030 = vmax.f32 %v1401, 0.0
        %v2031 = vmax.f32 %v1472, 0.0
        %v2032 = vmax.f32 %v1474, 0.0
        %v2033 = vmax.f32 %v1545, 0.0
        %v2034 = vmax.f32 %v1547, 0.0
        %v2035 = vmax.f32 %v1618, 0.0
        %v2036 = vmax.f32 %v1620, 0.0
        %v2037 = vmax.f32 %v1691, 0.0
        %v2038 = vmax.f32 %v1693, 0.0
        %v2039 = vmax.f32 %v1764, 0.0
        %v2040 = vmax.f32 %v1766, 0.0
        %v2041 = vmax.f32 %v1837, 0.0
        %v2042 = vmax.f32 %v1839, 0.0
        %v2043 = vmax.f32 %v748, 0.0
        %v2044 = vmax.f32 %v750, 0.0
        %v2045 = vmax.f32 %v821, 0.0
        %v2046 = vmax.f32 %v823, 0.0
        %v2047 = vmax.f32 %v894, 0.0
        %v2048 = vmax.f32 %v896, 0.0
        %v2049 = vmax.f32 %v967, 0.0
        %v2050 = vmax.f32 %v969, 0.0
        %v2051 = vmax.f32 %v1040, 0.0
        %v2052 = vmax.f32 %v1042, 0.0
        %v2053 = vmax.f32 %v1113, 0.0
        %v2054 = vmax.f32 %v1115, 0.0
        %v2055 = vmax.f32 %v1186, 0.0
        %v2056 = vmax.f32 %v1188, 0.0
        %v2057 = vmax.f32 %v1259, 0.0
        %v2058 = vmax.f32 %v1261, 0.0
        %v2059 = vmax.f32 %v1332, 0.0
        %v2060 = vmax.f32 %v1334, 0.0
        %v2061 = vmax.f32 %v1405, 0.0
        %v2062 = vmax.f32 %v1407, 0.0
        %v2063 = vmax.f32 %v1478, 0.0
        %v2064 = vmax.f32 %v1480, 0.0
        %v2065 = vmax.f32 %v1551, 0.0
        %v2066 = vmax.f32 %v1553, 0.0
        %v2067 = vmax.f32 %v1624, 0.0
        %v2068 = vmax.f32 %v1626, 0.0
        %v2069 = vmax.f32 %v1697, 0.0
        %v2070 = vmax.f32 %v1699, 0.0
        %v2071 = vmax.f32 %v1770, 0.0
        %v2072 = vmax.f32 %v1772, 0.0
        %v2073 = vmax.f32 %v1843, 0.0
        %v2074 = vmax.f32 %v1845, 0.0
        %v2075 = vmax.f32 %v752, 0.0
        %v2076 = vmax.f32 %v754, 0.0
        %v2077 = vmax.f32 %v825, 0.0
        %v2078 = vmax.f32 %v827, 0.0
        %v2079 = vmax.f32 %v898, 0.0
        %v2080 = vmax.f32 %v900, 0.0
        %v2081 = vmax.f32 %v971, 0.0
        %v2082 = vmax.f32 %v973, 0.0
        %v2083 = vmax.f32 %v1044, 0.0
        %v2084 = vmax.f32 %v1046, 0.0
        %v2085 = vmax.f32 %v1117, 0.0
        %v2086 = vmax.f32 %v1119, 0.0
        %v2087 = vmax.f32 %v1190, 0.0
        %v2088 = vmax.f32 %v1192, 0.0
        %v2089 = vmax.f32 %v1263, 0.0
        %v2090 = vmax.f32 %v1265, 0.0
        %v2091 = vmax.f32 %v1336, 0.0
        %v2092 = vmax.f32 %v1338, 0.0
        %v2093 = vmax.f32 %v1409, 0.0
        %v2094 = vmax.f32 %v1411, 0.0
        %v2095 = vmax.f32 %v1482, 0.0
        %v2096 = vmax.f32 %v1484, 0.0
        %v2097 = vmax.f32 %v1555, 0.0
        %v2098 = vmax.f32 %v1557, 0.0
        %v2099 = vmax.f32 %v1628, 0.0
        %v2100 = vmax.f32 %v1630, 0.0
        %v2101 = vmax.f32 %v1701, 0.0
        %v2102 = vmax.f32 %v1703, 0.0
        %v2103 = vmax.f32 %v1774, 0.0
        %v2104 = vmax.f32 %v1776, 0.0
        %v2105 = vmax.f32 %v1847, 0.0
        %v2106 = vmax.f32 %v1849, 0.0
        %v2107 = vpack.c.bf16 %v1883, %v1851
        %v2108 = vpack.c.bf16 %v1884, %v1852
        %v2109 = vpack.c.bf16 %v1885, %v1853
        %v2110 = vpack.c.bf16 %v1886, %v1854
        %v2111 = vpack.c.bf16 %v1887, %v1855
        %v2112 = vpack.c.bf16 %v1888, %v1856
        %v2113 = vpack.c.bf16 %v1889, %v1857
        %v2114 = vpack.c.bf16 %v1890, %v1858
        %v2115 = vpack.c.bf16 %v1891, %v1859
        %v2116 = vpack.c.bf16 %v1892, %v1860
        %v2117 = vpack.c.bf16 %v1893, %v1861
        %v2118 = vpack.c.bf16 %v1894, %v1862
        %v2119 = vpack.c.bf16 %v1895, %v1863
        %v2120 = vpack.c.bf16 %v1896, %v1864
        %v2121 = vpack.c.bf16 %v1897, %v1865
        %v2122 = vpack.c.bf16 %v1898, %v1866
        %v2123 = vpack.c.bf16 %v1899, %v1867
        %v2124 = vpack.c.bf16 %v1900, %v1868
        %v2125 = vpack.c.bf16 %v1901, %v1869
        %v2126 = vpack.c.bf16 %v1902, %v1870
        %v2127 = vpack.c.bf16 %v1903, %v1871
        %v2128 = vpack.c.bf16 %v1904, %v1872
        %v2129 = vpack.c.bf16 %v1905, %v1873
        %v2130 = vpack.c.bf16 %v1906, %v1874
        %v2131 = vpack.c.bf16 %v1907, %v1875
        %v2132 = vpack.c.bf16 %v1908, %v1876
        %v2133 = vpack.c.bf16 %v1909, %v1877
        %v2134 = vpack.c.bf16 %v1910, %v1878
        %v2135 = vpack.c.bf16 %v1911, %v1879
        %v2136 = vpack.c.bf16 %v1912, %v1880
        %v2137 = vpack.c.bf16 %v1913, %v1881
        %v2138 = vpack.c.bf16 %v1914, %v1882
        %v2139 = vpack.c.bf16 %v1947, %v1915
        %v2140 = vpack.c.bf16 %v1948, %v1916
        %v2141 = vpack.c.bf16 %v1949, %v1917
        %v2142 = vpack.c.bf16 %v1950, %v1918
        %v2143 = vpack.c.bf16 %v1951, %v1919
        %v2144 = vpack.c.bf16 %v1952, %v1920
        %v2145 = vpack.c.bf16 %v1953, %v1921
        %v2146 = vpack.c.bf16 %v1954, %v1922
        %v2147 = vpack.c.bf16 %v1955, %v1923
        %v2148 = vpack.c.bf16 %v1956, %v1924
        %v2149 = vpack.c.bf16 %v1957, %v1925
        %v2150 = vpack.c.bf16 %v1958, %v1926
        %v2151 = vpack.c.bf16 %v1959, %v1927
        %v2152 = vpack.c.bf16 %v1960, %v1928
        %v2153 = vpack.c.bf16 %v1961, %v1929
        %v2154 = vpack.c.bf16 %v1962, %v1930
        %v2155 = vpack.c.bf16 %v1963, %v1931
        %v2156 = vpack.c.bf16 %v1964, %v1932
        %v2157 = vpack.c.bf16 %v1965, %v1933
        %v2158 = vpack.c.bf16 %v1966, %v1934
        %v2159 = vpack.c.bf16 %v1967, %v1935
        %v2160 = vpack.c.bf16 %v1968, %v1936
        %v2161 = vpack.c.bf16 %v1969, %v1937
        %v2162 = vpack.c.bf16 %v1970, %v1938
        %v2163 = vpack.c.bf16 %v1971, %v1939
        %v2164 = vpack.c.bf16 %v1972, %v1940
        %v2165 = vpack.c.bf16 %v1973, %v1941
        %v2166 = vpack.c.bf16 %v1974, %v1942
        %v2167 = vpack.c.bf16 %v1975, %v1943
        %v2168 = vpack.c.bf16 %v1976, %v1944
        %v2169 = vpack.c.bf16 %v1977, %v1945
        %v2170 = vpack.c.bf16 %v1978, %v1946
        %v2171 = vpack.c.bf16 %v2011, %v1979
        %v2172 = vpack.c.bf16 %v2012, %v1980
        %v2173 = vpack.c.bf16 %v2013, %v1981
        %v2174 = vpack.c.bf16 %v2014, %v1982
        %v2175 = vpack.c.bf16 %v2015, %v1983
        %v2176 = vpack.c.bf16 %v2016, %v1984
        %v2177 = vpack.c.bf16 %v2017, %v1985
        %v2178 = vpack.c.bf16 %v2018, %v1986
        %v2179 = vpack.c.bf16 %v2019, %v1987
        %v2180 = vpack.c.bf16 %v2020, %v1988
        %v2181 = vpack.c.bf16 %v2021, %v1989
        %v2182 = vpack.c.bf16 %v2022, %v1990
        %v2183 = vpack.c.bf16 %v2023, %v1991
        %v2184 = vpack.c.bf16 %v2024, %v1992
        %v2185 = vpack.c.bf16 %v2025, %v1993
        %v2186 = vpack.c.bf16 %v2026, %v1994
        %v2187 = vpack.c.bf16 %v2027, %v1995
        %v2188 = vpack.c.bf16 %v2028, %v1996
        %v2189 = vpack.c.bf16 %v2029, %v1997
        %v2190 = vpack.c.bf16 %v2030, %v1998
        %v2191 = vpack.c.bf16 %v2031, %v1999
        %v2192 = vpack.c.bf16 %v2032, %v2000
        %v2193 = vpack.c.bf16 %v2033, %v2001
        %v2194 = vpack.c.bf16 %v2034, %v2002
        %v2195 = vpack.c.bf16 %v2035, %v2003
        %v2196 = vpack.c.bf16 %v2036, %v2004
        %v2197 = vpack.c.bf16 %v2037, %v2005
        %v2198 = vpack.c.bf16 %v2038, %v2006
        %v2199 = vpack.c.bf16 %v2039, %v2007
        %v2200 = vpack.c.bf16 %v2040, %v2008
        %v2201 = vpack.c.bf16 %v2041, %v2009
        %v2202 = vpack.c.bf16 %v2042, %v2010
        %v2203 = vpack.c.bf16 %v2075, %v2043
        %v2204 = vpack.c.bf16 %v2076, %v2044
        %v2205 = vpack.c.bf16 %v2077, %v2045
        %v2206 = vpack.c.bf16 %v2078, %v2046
        %v2207 = vpack.c.bf16 %v2079, %v2047
        %v2208 = vpack.c.bf16 %v2080, %v2048
        %v2209 = vpack.c.bf16 %v2081, %v2049
        %v2210 = vpack.c.bf16 %v2082, %v2050
        %v2211 = vpack.c.bf16 %v2083, %v2051
        %v2212 = vpack.c.bf16 %v2084, %v2052
        %v2213 = vpack.c.bf16 %v2085, %v2053
        %v2214 = vpack.c.bf16 %v2086, %v2054
        %v2215 = vpack.c.bf16 %v2087, %v2055
        %v2216 = vpack.c.bf16 %v2088, %v2056
        %v2217 = vpack.c.bf16 %v2089, %v2057
        %v2218 = vpack.c.bf16 %v2090, %v2058
        %v2219 = vpack.c.bf16 %v2091, %v2059
        %v2220 = vpack.c.bf16 %v2092, %v2060
        %v2221 = vpack.c.bf16 %v2093, %v2061
        %v2222 = vpack.c.bf16 %v2094, %v2062
        %v2223 = vpack.c.bf16 %v2095, %v2063
        %v2224 = vpack.c.bf16 %v2096, %v2064
        %v2225 = vpack.c.bf16 %v2097, %v2065
        %v2226 = vpack.c.bf16 %v2098, %v2066
        %v2227 = vpack.c.bf16 %v2099, %v2067
        %v2228 = vpack.c.bf16 %v2100, %v2068
        %v2229 = vpack.c.bf16 %v2101, %v2069
        %v2230 = vpack.c.bf16 %v2102, %v2070
        %v2231 = vpack.c.bf16 %v2103, %v2071
        %v2232 = vpack.c.bf16 %v2104, %v2072
        %v2233 = vpack.c.bf16 %v2105, %v2073
        %v2234 = vpack.c.bf16 %v2106, %v2074
        %v2363 = vunpack.c.l.b16 %v2107
        %v2364 = vunpack.c.l.b16 %v2108
        %v2365 = vunpack.c.l.b16 %v2109
        %v2366 = vunpack.c.l.b16 %v2110
        %v2367 = vunpack.c.l.b16 %v2111
        %v2368 = vunpack.c.l.b16 %v2112
        %v2369 = vunpack.c.l.b16 %v2113
        %v2370 = vunpack.c.l.b16 %v2114
        %v2371 = vunpack.c.l.b16 %v2115
        %v2372 = vunpack.c.l.b16 %v2116
        %v2373 = vunpack.c.l.b16 %v2117
        %v2374 = vunpack.c.l.b16 %v2118
        %v2375 = vunpack.c.l.b16 %v2119
        %v2376 = vunpack.c.l.b16 %v2120
        %v2377 = vunpack.c.l.b16 %v2121
        %v2378 = vunpack.c.l.b16 %v2122
        %v2379 = vunpack.c.l.b16 %v2123
        %v2380 = vunpack.c.l.b16 %v2124
        %v2381 = vunpack.c.l.b16 %v2125
        %v2382 = vunpack.c.l.b16 %v2126
        %v2383 = vunpack.c.l.b16 %v2127
        %v2384 = vunpack.c.l.b16 %v2128
        %v2385 = vunpack.c.l.b16 %v2129
        %v2386 = vunpack.c.l.b16 %v2130
        %v2387 = vunpack.c.l.b16 %v2131
        %v2388 = vunpack.c.l.b16 %v2132
        %v2389 = vunpack.c.l.b16 %v2133
        %v2390 = vunpack.c.l.b16 %v2134
        %v2391 = vunpack.c.l.b16 %v2135
        %v2392 = vunpack.c.l.b16 %v2136
        %v2393 = vunpack.c.l.b16 %v2137
        %v2394 = vunpack.c.l.b16 %v2138
        %v2395 = vunpack.c.h.b16 %v2107
        %v2396 = vunpack.c.h.b16 %v2108
        %v2397 = vunpack.c.h.b16 %v2109
        %v2398 = vunpack.c.h.b16 %v2110
        %v2399 = vunpack.c.h.b16 %v2111
        %v2400 = vunpack.c.h.b16 %v2112
        %v2401 = vunpack.c.h.b16 %v2113
        %v2402 = vunpack.c.h.b16 %v2114
        %v2403 = vunpack.c.h.b16 %v2115
        %v2404 = vunpack.c.h.b16 %v2116
        %v2405 = vunpack.c.h.b16 %v2117
        %v2406 = vunpack.c.h.b16 %v2118
        %v2407 = vunpack.c.h.b16 %v2119
        %v2408 = vunpack.c.h.b16 %v2120
        %v2409 = vunpack.c.h.b16 %v2121
        %v2410 = vunpack.c.h.b16 %v2122
        %v2411 = vunpack.c.h.b16 %v2123
        %v2412 = vunpack.c.h.b16 %v2124
        %v2413 = vunpack.c.h.b16 %v2125
        %v2414 = vunpack.c.h.b16 %v2126
        %v2415 = vunpack.c.h.b16 %v2127
        %v2416 = vunpack.c.h.b16 %v2128
        %v2417 = vunpack.c.h.b16 %v2129
        %v2418 = vunpack.c.h.b16 %v2130
        %v2419 = vunpack.c.h.b16 %v2131
        %v2420 = vunpack.c.h.b16 %v2132
        %v2421 = vunpack.c.h.b16 %v2133
        %v2422 = vunpack.c.h.b16 %v2134
        %v2423 = vunpack.c.h.b16 %v2135
        %v2424 = vunpack.c.h.b16 %v2136
        %v2425 = vunpack.c.h.b16 %v2137
        %v2426 = vunpack.c.h.b16 %v2138
        %v2427 = vunpack.c.l.b16 %v2139
        %v2428 = vunpack.c.l.b16 %v2140
        %v2429 = vunpack.c.l.b16 %v2141
        %v2430 = vunpack.c.l.b16 %v2142
        %v2431 = vunpack.c.l.b16 %v2143
        %v2432 = vunpack.c.l.b16 %v2144
        %v2433 = vunpack.c.l.b16 %v2145
        %v2434 = vunpack.c.l.b16 %v2146
        %v2435 = vunpack.c.l.b16 %v2147
        %v2436 = vunpack.c.l.b16 %v2148
        %v2437 = vunpack.c.l.b16 %v2149
        %v2438 = vunpack.c.l.b16 %v2150
        %v2439 = vunpack.c.l.b16 %v2151
        %v2440 = vunpack.c.l.b16 %v2152
        %v2441 = vunpack.c.l.b16 %v2153
        %v2442 = vunpack.c.l.b16 %v2154
        %v2443 = vunpack.c.l.b16 %v2155
        %v2444 = vunpack.c.l.b16 %v2156
        %v2445 = vunpack.c.l.b16 %v2157
        %v2446 = vunpack.c.l.b16 %v2158
        %v2447 = vunpack.c.l.b16 %v2159
        %v2448 = vunpack.c.l.b16 %v2160
        %v2449 = vunpack.c.l.b16 %v2161
        %v2450 = vunpack.c.l.b16 %v2162
        %v2451 = vunpack.c.l.b16 %v2163
        %v2452 = vunpack.c.l.b16 %v2164
        %v2453 = vunpack.c.l.b16 %v2165
        %v2454 = vunpack.c.l.b16 %v2166
        %v2455 = vunpack.c.l.b16 %v2167
        %v2456 = vunpack.c.l.b16 %v2168
        %v2457 = vunpack.c.l.b16 %v2169
        %v2458 = vunpack.c.l.b16 %v2170
        %v2459 = vunpack.c.h.b16 %v2139
        %v2460 = vunpack.c.h.b16 %v2140
        %v2461 = vunpack.c.h.b16 %v2141
        %v2462 = vunpack.c.h.b16 %v2142
        %v2463 = vunpack.c.h.b16 %v2143
        %v2464 = vunpack.c.h.b16 %v2144
        %v2465 = vunpack.c.h.b16 %v2145
        %v2466 = vunpack.c.h.b16 %v2146
        %v2467 = vunpack.c.h.b16 %v2147
        %v2468 = vunpack.c.h.b16 %v2148
        %v2469 = vunpack.c.h.b16 %v2149
        %v2470 = vunpack.c.h.b16 %v2150
        %v2471 = vunpack.c.h.b16 %v2151
        %v2472 = vunpack.c.h.b16 %v2152
        %v2473 = vunpack.c.h.b16 %v2153
        %v2474 = vunpack.c.h.b16 %v2154
        %v2475 = vunpack.c.h.b16 %v2155
        %v2476 = vunpack.c.h.b16 %v2156
        %v2477 = vunpack.c.h.b16 %v2157
        %v2478 = vunpack.c.h.b16 %v2158
        %v2479 = vunpack.c.h.b16 %v2159
        %v2480 = vunpack.c.h.b16 %v2160
        %v2481 = vunpack.c.h.b16 %v2161
        %v2482 = vunpack.c.h.b16 %v2162
        %v2483 = vunpack.c.h.b16 %v2163
        %v2484 = vunpack.c.h.b16 %v2164
        %v2485 = vunpack.c.h.b16 %v2165
        %v2486 = vunpack.c.h.b16 %v2166
        %v2487 = vunpack.c.h.b16 %v2167
        %v2488 = vunpack.c.h.b16 %v2168
        %v2489 = vunpack.c.h.b16 %v2169
        %v2490 = vunpack.c.h.b16 %v2170
        %v2491 = vunpack.c.l.b16 %v2171
        %v2492 = vunpack.c.l.b16 %v2172
        %v2493 = vunpack.c.l.b16 %v2173
        %v2494 = vunpack.c.l.b16 %v2174
        %v2495 = vunpack.c.l.b16 %v2175
        %v2496 = vunpack.c.l.b16 %v2176
        %v2497 = vunpack.c.l.b16 %v2177
        %v2498 = vunpack.c.l.b16 %v2178
        %v2499 = vunpack.c.l.b16 %v2179
        %v2500 = vunpack.c.l.b16 %v2180
        %v2501 = vunpack.c.l.b16 %v2181
        %v2502 = vunpack.c.l.b16 %v2182
        %v2503 = vunpack.c.l.b16 %v2183
        %v2504 = vunpack.c.l.b16 %v2184
        %v2505 = vunpack.c.l.b16 %v2185
        %v2506 = vunpack.c.l.b16 %v2186
        %v2507 = vunpack.c.l.b16 %v2187
        %v2508 = vunpack.c.l.b16 %v2188
        %v2509 = vunpack.c.l.b16 %v2189
        %v2510 = vunpack.c.l.b16 %v2190
        %v2511 = vunpack.c.l.b16 %v2191
        %v2512 = vunpack.c.l.b16 %v2192
        %v2513 = vunpack.c.l.b16 %v2193
        %v2514 = vunpack.c.l.b16 %v2194
        %v2515 = vunpack.c.l.b16 %v2195
        %v2516 = vunpack.c.l.b16 %v2196
        %v2517 = vunpack.c.l.b16 %v2197
        %v2518 = vunpack.c.l.b16 %v2198
        %v2519 = vunpack.c.l.b16 %v2199
        %v2520 = vunpack.c.l.b16 %v2200
        %v2521 = vunpack.c.l.b16 %v2201
        %v2522 = vunpack.c.l.b16 %v2202
        %v2523 = vunpack.c.h.b16 %v2171
        %v2524 = vunpack.c.h.b16 %v2172
        %v2525 = vunpack.c.h.b16 %v2173
        %v2526 = vunpack.c.h.b16 %v2174
        %v2527 = vunpack.c.h.b16 %v2175
        %v2528 = vunpack.c.h.b16 %v2176
        %v2529 = vunpack.c.h.b16 %v2177
        %v2530 = vunpack.c.h.b16 %v2178
        %v2531 = vunpack.c.h.b16 %v2179
        %v2532 = vunpack.c.h.b16 %v2180
        %v2533 = vunpack.c.h.b16 %v2181
        %v2534 = vunpack.c.h.b16 %v2182
        %v2535 = vunpack.c.h.b16 %v2183
        %v2536 = vunpack.c.h.b16 %v2184
        %v2537 = vunpack.c.h.b16 %v2185
        %v2538 = vunpack.c.h.b16 %v2186
        %v2539 = vunpack.c.h.b16 %v2187
        %v2540 = vunpack.c.h.b16 %v2188
        %v2541 = vunpack.c.h.b16 %v2189
        %v2542 = vunpack.c.h.b16 %v2190
        %v2543 = vunpack.c.h.b16 %v2191
        %v2544 = vunpack.c.h.b16 %v2192
        %v2545 = vunpack.c.h.b16 %v2193
        %v2546 = vunpack.c.h.b16 %v2194
        %v2547 = vunpack.c.h.b16 %v2195
        %v2548 = vunpack.c.h.b16 %v2196
        %v2549 = vunpack.c.h.b16 %v2197
        %v2550 = vunpack.c.h.b16 %v2198
        %v2551 = vunpack.c.h.b16 %v2199
        %v2552 = vunpack.c.h.b16 %v2200
        %v2553 = vunpack.c.h.b16 %v2201
        %v2554 = vunpack.c.h.b16 %v2202
        %v2555 = vunpack.c.l.b16 %v2203
        %v2556 = vunpack.c.l.b16 %v2204
        %v2557 = vunpack.c.l.b16 %v2205
        %v2558 = vunpack.c.l.b16 %v2206
        %v2559 = vunpack.c.l.b16 %v2207
        %v2560 = vunpack.c.l.b16 %v2208
        %v2561 = vunpack.c.l.b16 %v2209
        %v2562 = vunpack.c.l.b16 %v2210
        %v2563 = vunpack.c.l.b16 %v2211
        %v2564 = vunpack.c.l.b16 %v2212
        %v2565 = vunpack.c.l.b16 %v2213
        %v2566 = vunpack.c.l.b16 %v2214
        %v2567 = vunpack.c.l.b16 %v2215
        %v2568 = vunpack.c.l.b16 %v2216
        %v2569 = vunpack.c.l.b16 %v2217
        %v2570 = vunpack.c.l.b16 %v2218
        %v2571 = vunpack.c.l.b16 %v2219
        %v2572 = vunpack.c.l.b16 %v2220
        %v2573 = vunpack.c.l.b16 %v2221
        %v2574 = vunpack.c.l.b16 %v2222
        %v2575 = vunpack.c.l.b16 %v2223
        %v2576 = vunpack.c.l.b16 %v2224
        %v2577 = vunpack.c.l.b16 %v2225
        %v2578 = vunpack.c.l.b16 %v2226
        %v2579 = vunpack.c.l.b16 %v2227
        %v2580 = vunpack.c.l.b16 %v2228
        %v2581 = vunpack.c.l.b16 %v2229
        %v2582 = vunpack.c.l.b16 %v2230
        %v2583 = vunpack.c.l.b16 %v2231
        %v2584 = vunpack.c.l.b16 %v2232
        %v2585 = vunpack.c.l.b16 %v2233
        %v2586 = vunpack.c.l.b16 %v2234
        %v2587 = vunpack.c.h.b16 %v2203
        %v2588 = vunpack.c.h.b16 %v2204
        %v2589 = vunpack.c.h.b16 %v2205
        %v2590 = vunpack.c.h.b16 %v2206
        %v2591 = vunpack.c.h.b16 %v2207
        %v2592 = vunpack.c.h.b16 %v2208
        %v2593 = vunpack.c.h.b16 %v2209
        %v2594 = vunpack.c.h.b16 %v2210
        %v2595 = vunpack.c.h.b16 %v2211
        %v2596 = vunpack.c.h.b16 %v2212
        %v2597 = vunpack.c.h.b16 %v2213
        %v2598 = vunpack.c.h.b16 %v2214
        %v2599 = vunpack.c.h.b16 %v2215
        %v2600 = vunpack.c.h.b16 %v2216
        %v2601 = vunpack.c.h.b16 %v2217
        %v2602 = vunpack.c.h.b16 %v2218
        %v2603 = vunpack.c.h.b16 %v2219
        %v2604 = vunpack.c.h.b16 %v2220
        %v2605 = vunpack.c.h.b16 %v2221
        %v2606 = vunpack.c.h.b16 %v2222
        %v2607 = vunpack.c.h.b16 %v2223
        %v2608 = vunpack.c.h.b16 %v2224
        %v2609 = vunpack.c.h.b16 %v2225
        %v2610 = vunpack.c.h.b16 %v2226
        %v2611 = vunpack.c.h.b16 %v2227
        %v2612 = vunpack.c.h.b16 %v2228
        %v2613 = vunpack.c.h.b16 %v2229
        %v2614 = vunpack.c.h.b16 %v2230
        %v2615 = vunpack.c.h.b16 %v2231
        %v2616 = vunpack.c.h.b16 %v2232
        %v2617 = vunpack.c.h.b16 %v2233
        %v2618 = vunpack.c.h.b16 %v2234
        %v2619 = vpack.c.b16 %v2364, %v2363
        %v2620 = vpack.c.b16 %v2366, %v2365
        %v2621 = vpack.c.b16 %v2368, %v2367
        %v2622 = vpack.c.b16 %v2370, %v2369
        %v2623 = vpack.c.b16 %v2372, %v2371
        %v2624 = vpack.c.b16 %v2374, %v2373
        %v2625 = vpack.c.b16 %v2376, %v2375
        %v2626 = vpack.c.b16 %v2378, %v2377
        %v2627 = vpack.c.b16 %v2380, %v2379
        %v2628 = vpack.c.b16 %v2382, %v2381
        %v2629 = vpack.c.b16 %v2384, %v2383
        %v2630 = vpack.c.b16 %v2386, %v2385
        %v2631 = vpack.c.b16 %v2388, %v2387
        %v2632 = vpack.c.b16 %v2390, %v2389
        %v2633 = vpack.c.b16 %v2392, %v2391
        %v2634 = vpack.c.b16 %v2394, %v2393
        %v2635 = vpack.c.b16 %v2396, %v2395
        %v2636 = vpack.c.b16 %v2398, %v2397
        %v2637 = vpack.c.b16 %v2400, %v2399
        %v2638 = vpack.c.b16 %v2402, %v2401
        %v2639 = vpack.c.b16 %v2404, %v2403
        %v2640 = vpack.c.b16 %v2406, %v2405
        %v2641 = vpack.c.b16 %v2408, %v2407
        %v2642 = vpack.c.b16 %v2410, %v2409
        %v2643 = vpack.c.b16 %v2412, %v2411
        %v2644 = vpack.c.b16 %v2414, %v2413
        %v2645 = vpack.c.b16 %v2416, %v2415
        %v2646 = vpack.c.b16 %v2418, %v2417
        %v2647 = vpack.c.b16 %v2420, %v2419
        %v2648 = vpack.c.b16 %v2422, %v2421
        %v2649 = vpack.c.b16 %v2424, %v2423
        %v2650 = vpack.c.b16 %v2426, %v2425
        %v2651 = vpack.c.b16 %v2428, %v2427
        %v2652 = vpack.c.b16 %v2430, %v2429
        %v2653 = vpack.c.b16 %v2432, %v2431
        %v2654 = vpack.c.b16 %v2434, %v2433
        %v2655 = vpack.c.b16 %v2436, %v2435
        %v2656 = vpack.c.b16 %v2438, %v2437
        %v2657 = vpack.c.b16 %v2440, %v2439
        %v2658 = vpack.c.b16 %v2442, %v2441
        %v2659 = vpack.c.b16 %v2444, %v2443
        %v2660 = vpack.c.b16 %v2446, %v2445
        %v2661 = vpack.c.b16 %v2448, %v2447
        %v2662 = vpack.c.b16 %v2450, %v2449
        %v2663 = vpack.c.b16 %v2452, %v2451
        %v2664 = vpack.c.b16 %v2454, %v2453
        %v2665 = vpack.c.b16 %v2456, %v2455
        %v2666 = vpack.c.b16 %v2458, %v2457
        %v2667 = vpack.c.b16 %v2460, %v2459
        %v2668 = vpack.c.b16 %v2462, %v2461
        %v2669 = vpack.c.b16 %v2464, %v2463
        %v2670 = vpack.c.b16 %v2466, %v2465
        %v2671 = vpack.c.b16 %v2468, %v2467
        %v2672 = vpack.c.b16 %v2470, %v2469
        %v2673 = vpack.c.b16 %v2472, %v2471
        %v2674 = vpack.c.b16 %v2474, %v2473
        %v2675 = vpack.c.b16 %v2476, %v2475
        %v2676 = vpack.c.b16 %v2478, %v2477
        %v2677 = vpack.c.b16 %v2480, %v2479
        %v2678 = vpack.c.b16 %v2482, %v2481
        %v2679 = vpack.c.b16 %v2484, %v2483
        %v2680 = vpack.c.b16 %v2486, %v2485
        %v2681 = vpack.c.b16 %v2488, %v2487
        %v2682 = vpack.c.b16 %v2490, %v2489
        %v2683 = vpack.c.b16 %v2492, %v2491
        %v2684 = vpack.c.b16 %v2494, %v2493
        %v2685 = vpack.c.b16 %v2496, %v2495
        %v2686 = vpack.c.b16 %v2498, %v2497
        %v2687 = vpack.c.b16 %v2500, %v2499
        %v2688 = vpack.c.b16 %v2502, %v2501
        %v2689 = vpack.c.b16 %v2504, %v2503
        %v2690 = vpack.c.b16 %v2506, %v2505
        %v2691 = vpack.c.b16 %v2508, %v2507
        %v2692 = vpack.c.b16 %v2510, %v2509
        %v2693 = vpack.c.b16 %v2512, %v2511
        %v2694 = vpack.c.b16 %v2514, %v2513
        %v2695 = vpack.c.b16 %v2516, %v2515
        %v2696 = vpack.c.b16 %v2518, %v2517
        %v2697 = vpack.c.b16 %v2520, %v2519
        %v2698 = vpack.c.b16 %v2522, %v2521
        %v2699 = vpack.c.b16 %v2524, %v2523
        %v2700 = vpack.c.b16 %v2526, %v2525
        %v2701 = vpack.c.b16 %v2528, %v2527
        %v2702 = vpack.c.b16 %v2530, %v2529
        %v2703 = vpack.c.b16 %v2532, %v2531
        %v2704 = vpack.c.b16 %v2534, %v2533
        %v2705 = vpack.c.b16 %v2536, %v2535
        %v2706 = vpack.c.b16 %v2538, %v2537
        %v2707 = vpack.c.b16 %v2540, %v2539
        %v2708 = vpack.c.b16 %v2542, %v2541
        %v2709 = vpack.c.b16 %v2544, %v2543
        %v2710 = vpack.c.b16 %v2546, %v2545
        %v2711 = vpack.c.b16 %v2548, %v2547
        %v2712 = vpack.c.b16 %v2550, %v2549
        %v2713 = vpack.c.b16 %v2552, %v2551
        %v2714 = vpack.c.b16 %v2554, %v2553
        %v2715 = vpack.c.b16 %v2556, %v2555
        %v2716 = vpack.c.b16 %v2558, %v2557
        %v2717 = vpack.c.b16 %v2560, %v2559
        %v2718 = vpack.c.b16 %v2562, %v2561
        %v2719 = vpack.c.b16 %v2564, %v2563
        %v2720 = vpack.c.b16 %v2566, %v2565
        %v2721 = vpack.c.b16 %v2568, %v2567
        %v2722 = vpack.c.b16 %v2570, %v2569
        %v2723 = vpack.c.b16 %v2572, %v2571
        %v2724 = vpack.c.b16 %v2574, %v2573
        %v2725 = vpack.c.b16 %v2576, %v2575
        %v2726 = vpack.c.b16 %v2578, %v2577
        %v2727 = vpack.c.b16 %v2580, %v2579
        %v2728 = vpack.c.b16 %v2582, %v2581
        %v2729 = vpack.c.b16 %v2584, %v2583
        %v2730 = vpack.c.b16 %v2586, %v2585
        %v2731 = vpack.c.b16 %v2588, %v2587
        %v2732 = vpack.c.b16 %v2590, %v2589
        %v2733 = vpack.c.b16 %v2592, %v2591
        %v2734 = vpack.c.b16 %v2594, %v2593
        %v2735 = vpack.c.b16 %v2596, %v2595
        %v2736 = vpack.c.b16 %v2598, %v2597
        %v2737 = vpack.c.b16 %v2600, %v2599
        %v2738 = vpack.c.b16 %v2602, %v2601
        %v2739 = vpack.c.b16 %v2604, %v2603
        %v2740 = vpack.c.b16 %v2606, %v2605
        %v2741 = vpack.c.b16 %v2608, %v2607
        %v2742 = vpack.c.b16 %v2610, %v2609
        %v2743 = vpack.c.b16 %v2612, %v2611
        %v2744 = vpack.c.b16 %v2614, %v2613
        %v2745 = vpack.c.b16 %v2616, %v2615
        %v2746 = vpack.c.b16 %v2618, %v2617
        %2875 = vst [vmem:[%s206] sm:$0xff] %v2619
        %2876 = vst [vmem:[%s206 + $0x8] sm:$0xff] %v2620
        %2877 = vst [vmem:[%s206 + $0x10] sm:$0xff] %v2621
        %2878 = vst [vmem:[%s206 + $0x18] sm:$0xff] %v2622
        %2879 = vst [vmem:[%s206 + $0x20] sm:$0xff] %v2623
        %2880 = vst [vmem:[%s206 + $0x28] sm:$0xff] %v2624
        %2881 = vst [vmem:[%s206 + $0x30] sm:$0xff] %v2625
        %2882 = vst [vmem:[%s206 + $0x38] sm:$0xff] %v2626
        %2883 = vst [vmem:[%s206 + $0x40] sm:$0xff] %v2627
        %2884 = vst [vmem:[%s206 + $0x48] sm:$0xff] %v2628
        %2885 = vst [vmem:[%s206 + $0x50] sm:$0xff] %v2629
        %2886 = vst [vmem:[%s206 + $0x58] sm:$0xff] %v2630
        %2887 = vst [vmem:[%s206 + $0x60] sm:$0xff] %v2631
        %2888 = vst [vmem:[%s206 + $0x68] sm:$0xff] %v2632
        %2889 = vst [vmem:[%s206 + $0x70] sm:$0xff] %v2633
        %2890 = vst [vmem:[%s206 + $0x78] sm:$0xff] %v2634
        %2891 = vst [vmem:[%s206 + $0x80] sm:$0xff] %v2635
        %2892 = vst [vmem:[%s206 + $0x88] sm:$0xff] %v2636
        %2893 = vst [vmem:[%s206 + $0x90] sm:$0xff] %v2637
        %2894 = vst [vmem:[%s206 + $0x98] sm:$0xff] %v2638
        %2895 = vst [vmem:[%s206 + $0xa0] sm:$0xff] %v2639
        %2896 = vst [vmem:[%s206 + $0xa8] sm:$0xff] %v2640
        %2897 = vst [vmem:[%s206 + $0xb0] sm:$0xff] %v2641
        %2898 = vst [vmem:[%s206 + $0xb8] sm:$0xff] %v2642
        %2899 = vst [vmem:[%s206 + $0xc0] sm:$0xff] %v2643
        %2900 = vst [vmem:[%s206 + $0xc8] sm:$0xff] %v2644
        %2901 = vst [vmem:[%s206 + $0xd0] sm:$0xff] %v2645
        %2902 = vst [vmem:[%s206 + $0xd8] sm:$0xff] %v2646
        %2903 = vst [vmem:[%s206 + $0xe0] sm:$0xff] %v2647
        %2904 = vst [vmem:[%s206 + $0xe8] sm:$0xff] %v2648
        %2905 = vst [vmem:[%s206 + $0xf0] sm:$0xff] %v2649
        %2906 = vst [vmem:[%s206 + $0xf8] sm:$0xff] %v2650
        %2907 = vst [vmem:[%s206 + $0x100] sm:$0xff] %v2651
        %2908 = vst [vmem:[%s206 + $0x108] sm:$0xff] %v2652
        %2909 = vst [vmem:[%s206 + $0x110] sm:$0xff] %v2653
        %2910 = vst [vmem:[%s206 + $0x118] sm:$0xff] %v2654
        %2911 = vst [vmem:[%s206 + $0x120] sm:$0xff] %v2655
        %2912 = vst [vmem:[%s206 + $0x128] sm:$0xff] %v2656
        %2913 = vst [vmem:[%s206 + $0x130] sm:$0xff] %v2657
        %2914 = vst [vmem:[%s206 + $0x138] sm:$0xff] %v2658
        %2915 = vst [vmem:[%s206 + $0x140] sm:$0xff] %v2659
        %2916 = vst [vmem:[%s206 + $0x148] sm:$0xff] %v2660
        %2917 = vst [vmem:[%s206 + $0x150] sm:$0xff] %v2661
        %2918 = vst [vmem:[%s206 + $0x158] sm:$0xff] %v2662
        %2919 = vst [vmem:[%s206 + $0x160] sm:$0xff] %v2663
        %2920 = vst [vmem:[%s206 + $0x168] sm:$0xff] %v2664
        %2921 = vst [vmem:[%s206 + $0x170] sm:$0xff] %v2665
        %2922 = vst [vmem:[%s206 + $0x178] sm:$0xff] %v2666
        %2923 = vst [vmem:[%s206 + $0x180] sm:$0xff] %v2667
        %2924 = vst [vmem:[%s206 + $0x188] sm:$0xff] %v2668
        %2925 = vst [vmem:[%s206 + $0x190] sm:$0xff] %v2669
        %2926 = vst [vmem:[%s206 + $0x198] sm:$0xff] %v2670
        %2927 = vst [vmem:[%s206 + $0x1a0] sm:$0xff] %v2671
        %2928 = vst [vmem:[%s206 + $0x1a8] sm:$0xff] %v2672
        %2929 = vst [vmem:[%s206 + $0x1b0] sm:$0xff] %v2673
        %2930 = vst [vmem:[%s206 + $0x1b8] sm:$0xff] %v2674
        %2931 = vst [vmem:[%s206 + $0x1c0] sm:$0xff] %v2675
        %2932 = vst [vmem:[%s206 + $0x1c8] sm:$0xff] %v2676
        %2933 = vst [vmem:[%s206 + $0x1d0] sm:$0xff] %v2677
        %2934 = vst [vmem:[%s206 + $0x1d8] sm:$0xff] %v2678
        %2935 = vst [vmem:[%s206 + $0x1e0] sm:$0xff] %v2679
        %2936 = vst [vmem:[%s206 + $0x1e8] sm:$0xff] %v2680
        %2937 = vst [vmem:[%s206 + $0x1f0] sm:$0xff] %v2681
        %2938 = vst [vmem:[%s206 + $0x1f8] sm:$0xff] %v2682
        %2939 = vst [vmem:[%s206 + $0x200] sm:$0xff] %v2683
        %2940 = vst [vmem:[%s206 + $0x208] sm:$0xff] %v2684
        %2941 = vst [vmem:[%s206 + $0x210] sm:$0xff] %v2685
        %2942 = vst [vmem:[%s206 + $0x218] sm:$0xff] %v2686
        %2943 = vst [vmem:[%s206 + $0x220] sm:$0xff] %v2687
        %2944 = vst [vmem:[%s206 + $0x228] sm:$0xff] %v2688
        %2945 = vst [vmem:[%s206 + $0x230] sm:$0xff] %v2689
        %2946 = vst [vmem:[%s206 + $0x238] sm:$0xff] %v2690
        %2947 = vst [vmem:[%s206 + $0x240] sm:$0xff] %v2691
        %2948 = vst [vmem:[%s206 + $0x248] sm:$0xff] %v2692
        %2949 = vst [vmem:[%s206 + $0x250] sm:$0xff] %v2693
        %2950 = vst [vmem:[%s206 + $0x258] sm:$0xff] %v2694
        %2951 = vst [vmem:[%s206 + $0x260] sm:$0xff] %v2695
        %2952 = vst [vmem:[%s206 + $0x268] sm:$0xff] %v2696
        %2953 = vst [vmem:[%s206 + $0x270] sm:$0xff] %v2697
        %2954 = vst [vmem:[%s206 + $0x278] sm:$0xff] %v2698
        %2955 = vst [vmem:[%s206 + $0x280] sm:$0xff] %v2699
        %2956 = vst [vmem:[%s206 + $0x288] sm:$0xff] %v2700
        %2957 = vst [vmem:[%s206 + $0x290] sm:$0xff] %v2701
        %2958 = vst [vmem:[%s206 + $0x298] sm:$0xff] %v2702
        %2959 = vst [vmem:[%s206 + $0x2a0] sm:$0xff] %v2703
        %2960 = vst [vmem:[%s206 + $0x2a8] sm:$0xff] %v2704
        %2961 = vst [vmem:[%s206 + $0x2b0] sm:$0xff] %v2705
        %2962 = vst [vmem:[%s206 + $0x2b8] sm:$0xff] %v2706
        %2963 = vst [vmem:[%s206 + $0x2c0] sm:$0xff] %v2707
        %2964 = vst [vmem:[%s206 + $0x2c8] sm:$0xff] %v2708
        %2965 = vst [vmem:[%s206 + $0x2d0] sm:$0xff] %v2709
        %2966 = vst [vmem:[%s206 + $0x2d8] sm:$0xff] %v2710
        %2967 = vst [vmem:[%s206 + $0x2e0] sm:$0xff] %v2711
        %2968 = vst [vmem:[%s206 + $0x2e8] sm:$0xff] %v2712
        %2969 = vst [vmem:[%s206 + $0x2f0] sm:$0xff] %v2713
        %2970 = vst [vmem:[%s206 + $0x2f8] sm:$0xff] %v2714
        %2971 = vst [vmem:[%s206 + $0x300] sm:$0xff] %v2715
        %2972 = vst [vmem:[%s206 + $0x308] sm:$0xff] %v2716
        %2973 = vst [vmem:[%s206 + $0x310] sm:$0xff] %v2717
        %2974 = vst [vmem:[%s206 + $0x318] sm:$0xff] %v2718
        %2975 = vst [vmem:[%s206 + $0x320] sm:$0xff] %v2719
        %2976 = vst [vmem:[%s206 + $0x328] sm:$0xff] %v2720
        %2977 = vst [vmem:[%s206 + $0x330] sm:$0xff] %v2721
        %2978 = vst [vmem:[%s206 + $0x338] sm:$0xff] %v2722
        %2979 = vst [vmem:[%s206 + $0x340] sm:$0xff] %v2723
        %2980 = vst [vmem:[%s206 + $0x348] sm:$0xff] %v2724
        %2981 = vst [vmem:[%s206 + $0x350] sm:$0xff] %v2725
        %2982 = vst [vmem:[%s206 + $0x358] sm:$0xff] %v2726
        %2983 = vst [vmem:[%s206 + $0x360] sm:$0xff] %v2727
        %2984 = vst [vmem:[%s206 + $0x368] sm:$0xff] %v2728
        %2985 = vst [vmem:[%s206 + $0x370] sm:$0xff] %v2729
        %2986 = vst [vmem:[%s206 + $0x378] sm:$0xff] %v2730
        %2987 = vst [vmem:[%s206 + $0x380] sm:$0xff] %v2731
        %2988 = vst [vmem:[%s206 + $0x388] sm:$0xff] %v2732
        %2989 = vst [vmem:[%s206 + $0x390] sm:$0xff] %v2733
        %2990 = vst [vmem:[%s206 + $0x398] sm:$0xff] %v2734
        %2991 = vst [vmem:[%s206 + $0x3a0] sm:$0xff] %v2735
        %2992 = vst [vmem:[%s206 + $0x3a8] sm:$0xff] %v2736
        %2993 = vst [vmem:[%s206 + $0x3b0] sm:$0xff] %v2737
        %2994 = vst [vmem:[%s206 + $0x3b8] sm:$0xff] %v2738
        %2995 = vst [vmem:[%s206 + $0x3c0] sm:$0xff] %v2739
        %2996 = vst [vmem:[%s206 + $0x3c8] sm:$0xff] %v2740
        %2997 = vst [vmem:[%s206 + $0x3d0] sm:$0xff] %v2741
        %2998 = vst [vmem:[%s206 + $0x3d8] sm:$0xff] %v2742
        %2999 = vst [vmem:[%s206 + $0x3e0] sm:$0xff] %v2743
        %3000 = vst [vmem:[%s206 + $0x3e8] sm:$0xff] %v2744
        %3001 = vst [vmem:[%s206 + $0x3f0] sm:$0xff] %v2745
        %3002 = vst [vmem:[%s206 + $0x3f8] sm:$0xff] %v2746
        %s3003 = sand.u32 %s112, 1
        %s3004 = scalar_lea.sflag [#allocation4], %s3003
        %s3005 = sand.u32 %s112, 1
        %s3006 = smul.addr %s3005, 1024
        %s3007 = scalar_lea.vmem [#allocation5], %s3006
        // Predicated region
        $region37: #{tpu_custom_call.1} parent=31 // pred_check
          %p3008 = pneg %p122
        $region38: #{tpu_custom_call.1} parent=31 // pred_check_branch
          %3010 = sbr.rel (%p3008) target = $region40
        $region39: #{tpu_custom_call.1} parent=31 // pred_region
          %s3011 = smul.u32 32, %s25
          %s3013 = ssub.s32 16384, 16384
          %3014 = vsyncadd %s3004, %s3013
          %s3015 = smul.addr %s24, 256
          %s3016 = sadd.s32 %s3011, %s3015
          %s3017 = smul.addr %s3016, 64
          %s3018 = scalar_lea.hbm %s3, %s3017
          %s3019 = sshll.u32 %s3007, 4
          %s3020 = int_to_ptr.vmem [resolvable:$true] %s3019
          %3025 = dma.vmem_to_hbm [thread:$0]  %s3020, 16384, %s3018, %s3004, 2048, 2048, 128
        $region40: #{tpu_custom_call.1} parent=31 // pred_fallthru
          _
      $region32: #{tpu_custom_call.1} parent=5 // pred_fallthru
        _
      %p3026 = scmp.le.s32.totalorder 2, %s15
      // Predicated region
      $region41: #{tpu_custom_call.1} parent=5 // pred_check
        %p3027 = pneg %p3026
      $region42: #{tpu_custom_call.1} parent=5 // pred_check_branch
        %3029 = sbr.rel (%p3027) target = $region44
      $region43: #{tpu_custom_call.1} parent=5 // pred_region
        %s3030 = ssub.s32 %s15, 2
        // Predicated region
        $region45: #{tpu_custom_call.1} parent=43 // pred_check
          %p3031 = pneg %p128
        $region46: #{tpu_custom_call.1} parent=43 // pred_check_branch
          %3033 = sbr.rel (%p3031) target = $region48
        $region47: #{tpu_custom_call.1} parent=43 // pred_region
          %s3034 = sand.u32 %s113, 1
          %s3035 = scalar_lea.sflag [#allocation4], %s3034
          %s3036 = sand.u32 %s113, 1
          %s3037 = smul.addr %s3036, 1024
          %s3038 = scalar_lea.vmem [#allocation5], %s3037
          %3039 = dma.done %s3035, 16384
        $region48: #{tpu_custom_call.1} parent=43 // pred_fallthru
          _
      $region44: #{tpu_custom_call.1} parent=5 // pred_fallthru
        _
    $region6: #{tpu_custom_call.1} parent=1 // loop_footer
      %s19 = sadd.s32 1, %s15
    $region7: #{tpu_custom_call.1} parent=1 // loop_footer_branch
      %14 = sbr.rel target = $region3
    $region8: #{tpu_custom_call.1} parent=1 // loop_exit
      _
    %3040 = vsyncpa [#allocation3], 1
    %s3041 = scalar_lea.sflag [#allocation3], 1
    %3042 = vsyncpa %s3041, 1
    %3043 = vsyncpa [#allocation4], 1
    %s3044 = scalar_lea.sflag [#allocation4], 1
    %3045 = vsyncpa %s3044, 1

</llo_original>
